<compile_context>
chip_gen: v7x
topology: tpu7x:2x2x1
jax: 0.10.0
libtpu: 0.0.40
codegen_flags: <defaults>
</compile_context>

<pallas_src>
import numpy as np

import jax
import jax.numpy as jnp
from jax import lax
from jax.experimental import pallas as pl
from jax.experimental.pallas import tpu as pltpu

EPS = 1e-5


# ---------------------------------------------------------------------------
# Kernels
# ---------------------------------------------------------------------------
def _band_conv3x3(rows, wband_ref, sdn, sup):
    """3x3/stride1/pad1 conv of one image. rows: (H, W*Ci) -> (H, W*Co).

    wband_ref[dh] : (W*Ci, W*Co) banded weights for kernel row dh, with the dw
                    taps and W-direction zero padding folded in.
    sdn / sup     : (H, H) 0/1 shift matrices implementing the dh = 0 / 2
                    row offsets with H-direction zero padding (exact).
    """
    t0 = jnp.dot(rows, wband_ref[0], preferred_element_type=jnp.float32)
    t1 = jnp.dot(rows, wband_ref[1], preferred_element_type=jnp.float32)
    t2 = jnp.dot(rows, wband_ref[2], preferred_element_type=jnp.float32)
    return (t1
            + jnp.dot(sdn, t0, preferred_element_type=jnp.float32)   # row h-1
            + jnp.dot(sup, t2, preferred_element_type=jnp.float32))  # row h+1


def conv1_stats_kernel(x_ref, w1b_ref, b1_ref, sdn_ref, sup_ref,
                       y1_ref, ssum_ref, ssq_ref):
    # x_ref   : (1, H, W*Cin)    one image, lane-dense rows
    # w1b_ref : (3, W*Cin, W*Cout)
    # b1_ref  : (1, W*Cout)      conv1 bias tiled over W
    # y1_ref  : (1, H, W*Cout)   conv1 + bias (pre-BN), lane-dense
    # ssum_ref, ssq_ref : (1, 1, W*Cout)  per-image partial BN statistics
    y = _band_conv3x3(x_ref[0], w1b_ref, sdn_ref[...], sup_ref[...]) + b1_ref[...]
    y1_ref[0] = y
    ssum_ref[0] = jnp.sum(y, axis=0, keepdims=True)
    ssq_ref[0] = jnp.sum(y * y, axis=0, keepdims=True)


def bn_relu_conv2_kernel(y1_ref, scale_ref, shift_ref, w2b_ref, b2_ref,
                         sdn_ref, sup_ref, o_ref):
    # Fused affine-BN + ReLU + conv2 for one image (all lane-dense).
    a = jnp.maximum(y1_ref[0] * scale_ref[...] + shift_ref[...], 0.0)
    out = _band_conv3x3(a, w2b_ref, sdn_ref[...], sup_ref[...]) + b2_ref[...]
    o_ref[0] = out.astype(o_ref.dtype)


# ---------------------------------------------------------------------------
# Wrapper helpers (tiny, run once on weights)
# ---------------------------------------------------------------------------
def _band_weights(w_hwio, width):
    """Fold the dw taps + W-direction zero padding of a 3x3 conv into banded
    weight matrices:  B[dh, u*Ci+ci, w*Co+co] = w[dh, dw, ci, co]
    with u = w + dw - 1 when 0 <= u < width (zero otherwise)."""
    kh, kw, ci, co = w_hwio.shape
    sel = np.zeros((kw, width, width), np.float32)
    for dw in range(kw):
        for w in range(width):
            u = w + dw - (kw // 2)
            if 0 <= u < width:
                sel[dw, u, w] = 1.0
    band = jnp.einsum('duw,hdio->huiwo', jnp.asarray(sel),
                      w_hwio.astype(jnp.float32),
                      precision=lax.Precision.HIGHEST)
    return band.reshape(kh, width * ci, width * co)


def _shift_matrices(h):
    sdn = jnp.asarray(np.eye(h, k=-1, dtype=np.float32))  # (sdn @ t)[r] = t[r-1]
    sup = jnp.asarray(np.eye(h, k=+1, dtype=np.float32))  # (sup @ t)[r] = t[r+1]
    return sdn, sup


# ---------------------------------------------------------------------------
# Forward
# ---------------------------------------------------------------------------
@jax.jit
def conv_ycf_forward(x_nchw, w1, b1, gamma, beta, w2, b2):
    """x_nchw: (N, Cin, H, W) float32 -> (N, Cout, H, W) float32."""
    N, Cin, H, W = x_nchw.shape
    Cout = w1.shape[-1]
    WCi, WCo = W * Cin, W * Cout

    # Lane-dense input rows (channels fastest on the lane dim). No jnp.pad:
    # padding is folded into the band weights / shift matrices.
    x_rows = jnp.transpose(x_nchw, (0, 2, 3, 1)).reshape(N, H, WCi)
    x_rows = x_rows.astype(jnp.float32)

    w1b = _band_weights(w1, W)                       # (3, W*Cin,  W*Cout)
    w2b = _band_weights(w2, W)                       # (3, W*Cout, W*Cout)
    b1_row = jnp.tile(b1.astype(jnp.float32), W)[None, :]   # (1, W*Cout)
    b2_row = jnp.tile(b2.astype(jnp.float32), W)[None, :]
    sdn, sup = _shift_matrices(H)                    # (H, H) each

    # --- pass 1: conv1 + bias, fused per-image BN statistics --------------
    y1, ssum, ssq = pl.pallas_call(
        conv1_stats_kernel,
        out_shape=(jax.ShapeDtypeStruct((N, H, WCo), jnp.float32),
                   jax.ShapeDtypeStruct((N, 1, WCo), jnp.float32),
                   jax.ShapeDtypeStruct((N, 1, WCo), jnp.float32)),
        grid_spec=pltpu.PrefetchScalarGridSpec(
            num_scalar_prefetch=0,
            grid=(N,),
            in_specs=[
                pl.BlockSpec((1, H, WCi), lambda n: (n, 0, 0)),
                pl.BlockSpec((3, WCi, WCo), lambda n: (0, 0, 0)),
                pl.BlockSpec((1, WCo), lambda n: (0, 0)),
                pl.BlockSpec((H, H), lambda n: (0, 0)),
                pl.BlockSpec((H, H), lambda n: (0, 0)),
            ],
            out_specs=[
                pl.BlockSpec((1, H, WCo), lambda n: (n, 0, 0)),
                pl.BlockSpec((1, 1, WCo), lambda n: (n, 0, 0)),
                pl.BlockSpec((1, 1, WCo), lambda n: (n, 0, 0)),
            ]),
        compiler_params=pltpu.CompilerParams(
            dimension_semantics=("parallel",)),
    )(x_rows, w1b, b1_row, sdn, sup)

    # --- tiny per-channel BN reduction (training mode, biased variance) ---
    cnt = float(N * H * W)
    s_c = jnp.sum(jnp.sum(ssum, axis=(0, 1)).reshape(W, Cout), axis=0)
    sq_c = jnp.sum(jnp.sum(ssq, axis=(0, 1)).reshape(W, Cout), axis=0)
    mean = s_c / cnt
    var = jnp.maximum(sq_c / cnt - mean * mean, 0.0)
    scale = gamma.astype(jnp.float32) * lax.rsqrt(var + EPS)
    shift = beta.astype(jnp.float32) - mean * scale
    scale_row = jnp.tile(scale, W)[None, :]          # (1, W*Cout) lane-dense
    shift_row = jnp.tile(shift, W)[None, :]

    # --- pass 2: BN + ReLU + conv2 -----------------------------------------
    out_rows = pl.pallas_call(
        bn_relu_conv2_kernel,
        out_shape=jax.ShapeDtypeStruct((N, H, WCo), jnp.float32),
        grid_spec=pltpu.PrefetchScalarGridSpec(
            num_scalar_prefetch=0,
            grid=(N,),
            in_specs=[
                pl.BlockSpec((1, H, WCo), lambda n: (n, 0, 0)),
                pl.BlockSpec((1, WCo), lambda n: (0, 0)),
                pl.BlockSpec((1, WCo), lambda n: (0, 0)),
                pl.BlockSpec((3, WCo, WCo), lambda n: (0, 0, 0)),
                pl.BlockSpec((1, WCo), lambda n: (0, 0)),
                pl.BlockSpec((H, H), lambda n: (0, 0)),
                pl.BlockSpec((H, H), lambda n: (0, 0)),
            ],
            out_specs=pl.BlockSpec((1, H, WCo), lambda n: (n, 0, 0))),
        compiler_params=pltpu.CompilerParams(
            dimension_semantics=("parallel",)),
    )(y1, scale_row, shift_row, w2b, b2_row, sdn, sup)

    out = out_rows.reshape(N, H, W, Cout)
    return jnp.transpose(out, (0, 3, 1, 2))


# ---------------------------------------------------------------------------
# Pure-JAX reference (mirrors the PyTorch module in training mode)
# ---------------------------------------------------------------------------
def ref_forward(x_nchw, w1, b1, gamma, beta, w2, b2):
    dn = ('NCHW', 'HWIO', 'NCHW')
    y = lax.conv_general_dilated(x_nchw, w1, (1, 1), 'SAME', dimension_numbers=dn)
    y = y + b1[None, :, None, None]
    mean = jnp.mean(y, axis=(0, 2, 3), keepdims=True)
    var = jnp.mean((y - mean) ** 2, axis=(0, 2, 3), keepdims=True)
    y = (y - mean) * lax.rsqrt(var + EPS) * gamma[None, :, None, None] \
        + beta[None, :, None, None]
    y = jnp.maximum(y, 0.0)
    z = lax.conv_general_dilated(y, w2, (1, 1), 'SAME', dimension_numbers=dn)
    return z + b2[None, :, None, None]


if __name__ == "__main__":
    # Small shapes consistent with the module's forward.
    N, Cin, Cout, H, W = 2, 4, 8, 16, 16

    key = jax.random.PRNGKey(0)
    k_x, k_w1, k_b1, k_g, k_b, k_w2, k_b2 = jax.random.split(key, 7)

    x = jax.random.normal(k_x, (N, Cin, H, W), dtype=jnp.float32)

    # Deterministic synthetic parameters (shapes from the module's __init__).
    w1 = 0.1 * jax.random.normal(k_w1, (3, 3, Cin, Cout), dtype=jnp.float32)   # HWIO
    b1 = 0.1 * jax.random.normal(k_b1, (Cout,), dtype=jnp.float32)
    gamma = 1.0 + 0.1 * jax.random.normal(k_g, (Cout,), dtype=jnp.float32)     # BN weight
    beta = 0.1 * jax.random.normal(k_b, (Cout,), dtype=jnp.float32)            # BN bias
    w2 = 0.1 * jax.random.normal(k_w2, (3, 3, Cout, Cout), dtype=jnp.float32)  # HWIO
    b2 = 0.1 * jax.random.normal(k_b2, (Cout,), dtype=jnp.float32)

    out = conv_ycf_forward(x, w1, b1, gamma, beta, w2, b2)
    out = jax.block_until_ready(out)

    ref = ref_forward(x, w1, b1, gamma, beta, w2, b2)
    assert out.shape == (N, Cout, H, W), out.shape
    err = float(jnp.max(jnp.abs(out - ref)))
    assert err < 1e-3, err

    print("KERNEL_OK")
</pallas_src>

<mosaic_0001>
module attributes {stable_mosaic.version = 11 : i64} {
  func.func @conv1_stats_kernel(%arg0: i32, %arg1: memref<1x16x64xf32, #tpu.memory_space<vmem>>, %arg2: memref<3x64x128xf32, #tpu.memory_space<vmem>>, %arg3: memref<1x128xf32, #tpu.memory_space<vmem>>, %arg4: memref<16x16xf32, #tpu.memory_space<vmem>>, %arg5: memref<16x16xf32, #tpu.memory_space<vmem>>, %arg6: memref<1x16x128xf32, #tpu.memory_space<vmem>>, %arg7: memref<1x1x128xf32, #tpu.memory_space<vmem>>, %arg8: memref<1x1x128xf32, #tpu.memory_space<vmem>>) attributes {dimension_semantics = [#tpu.dimension_semantics<parallel>], iteration_bounds = array<i64: 2>, scalar_prefetch = 0 : i64, scratch_operands = 0 : i64, tpu.core_type = #tpu.core_type<tc>, window_params = [{transform_indices = @transform_0, window_bounds = array<i64: 1, 16, 64>}, {pipeline_mode = #tpu.pipeline_mode<synchronous>, transform_indices = @transform_1, window_bounds = array<i64: 3, 64, 128>}, {pipeline_mode = #tpu.pipeline_mode<synchronous>, transform_indices = @transform_2, window_bounds = array<i64: 1, 128>}, {pipeline_mode = #tpu.pipeline_mode<synchronous>, transform_indices = @transform_3, window_bounds = array<i64: 16, 16>}, {pipeline_mode = #tpu.pipeline_mode<synchronous>, transform_indices = @transform_4, window_bounds = array<i64: 16, 16>}, {transform_indices = @transform_5, window_bounds = array<i64: 1, 16, 128>}, {transform_indices = @transform_6, window_bounds = array<i64: 1, 1, 128>}, {transform_indices = @transform_7, window_bounds = array<i64: 1, 1, 128>}]} {
    %c0 = arith.constant 0 : index
    %c0_0 = arith.constant 0 : index
    %c0_1 = arith.constant 0 : index
    %0 = vector.load %arg1[%c0, %c0_0, %c0_1] : memref<1x16x64xf32, #tpu.memory_space<vmem>>, vector<1x16x64xf32>
    %1 = vector.shape_cast %0 : vector<1x16x64xf32> to vector<16x64xf32>
    %c0_2 = arith.constant 0 : index
    %c0_3 = arith.constant 0 : index
    %2 = vector.load %arg4[%c0_2, %c0_3] : memref<16x16xf32, #tpu.memory_space<vmem>>, vector<16x16xf32>
    %c0_4 = arith.constant 0 : index
    %c0_5 = arith.constant 0 : index
    %3 = vector.load %arg5[%c0_4, %c0_5] : memref<16x16xf32, #tpu.memory_space<vmem>>, vector<16x16xf32>
    %c0_6 = arith.constant 0 : index
    %c0_7 = arith.constant 0 : index
    %c0_8 = arith.constant 0 : index
    %4 = vector.load %arg2[%c0_6, %c0_7, %c0_8] : memref<3x64x128xf32, #tpu.memory_space<vmem>>, vector<1x64x128xf32>
    %5 = vector.shape_cast %4 : vector<1x64x128xf32> to vector<64x128xf32>
    %cst = arith.constant dense<0.000000e+00> : vector<16x128xf32>
    %6 = tpu.matmul %1, %5, %cst {dimension_numbers = #tpu.dot_dimension_numbers<[1], [0], [0], [1], [0, 0, 1, 1], [], []>} : vector<16x64xf32>, vector<64x128xf32>, vector<16x128xf32> -> vector<16x128xf32>
    %c1 = arith.constant 1 : index
    %c0_9 = arith.constant 0 : index
    %c0_10 = arith.constant 0 : index
    %7 = vector.load %arg2[%c1, %c0_9, %c0_10] : memref<3x64x128xf32, #tpu.memory_space<vmem>>, vector<1x64x128xf32>
    %8 = vector.shape_cast %7 : vector<1x64x128xf32> to vector<64x128xf32>
    %cst_11 = arith.constant dense<0.000000e+00> : vector<16x128xf32>
    %9 = tpu.matmul %1, %8, %cst_11 {dimension_numbers = #tpu.dot_dimension_numbers<[1], [0], [0], [1], [0, 0, 1, 1], [], []>} : vector<16x64xf32>, vector<64x128xf32>, vector<16x128xf32> -> vector<16x128xf32>
    %c2 = arith.constant 2 : index
    %c0_12 = arith.constant 0 : index
    %c0_13 = arith.constant 0 : index
    %10 = vector.load %arg2[%c2, %c0_12, %c0_13] : memref<3x64x128xf32, #tpu.memory_space<vmem>>, vector<1x64x128xf32>
    %11 = vector.shape_cast %10 : vector<1x64x128xf32> to vector<64x128xf32>
    %cst_14 = arith.constant dense<0.000000e+00> : vector<16x128xf32>
    %12 = tpu.matmul %1, %11, %cst_14 {dimension_numbers = #tpu.dot_dimension_numbers<[1], [0], [0], [1], [0, 0, 1, 1], [], []>} : vector<16x64xf32>, vector<64x128xf32>, vector<16x128xf32> -> vector<16x128xf32>
    %cst_15 = arith.constant dense<0.000000e+00> : vector<16x128xf32>
    %13 = tpu.matmul %2, %6, %cst_15 {dimension_numbers = #tpu.dot_dimension_numbers<[1], [0], [0], [1], [0, 0, 1, 1], [], []>} : vector<16x16xf32>, vector<16x128xf32>, vector<16x128xf32> -> vector<16x128xf32>
    %14 = arith.addf %9, %13 : vector<16x128xf32>
    %cst_16 = arith.constant dense<0.000000e+00> : vector<16x128xf32>
    %15 = tpu.matmul %3, %12, %cst_16 {dimension_numbers = #tpu.dot_dimension_numbers<[1], [0], [0], [1], [0, 0, 1, 1], [], []>} : vector<16x16xf32>, vector<16x128xf32>, vector<16x128xf32> -> vector<16x128xf32>
    %16 = arith.addf %14, %15 : vector<16x128xf32>
    %c0_17 = arith.constant 0 : index
    %c0_18 = arith.constant 0 : index
    %17 = vector.load %arg3[%c0_17, %c0_18] : memref<1x128xf32, #tpu.memory_space<vmem>>, vector<1x128xf32>
    %18 = vector.broadcast %17 : vector<1x128xf32> to vector<16x128xf32>
    %19 = arith.addf %16, %18 : vector<16x128xf32>
    %c0_19 = arith.constant 0 : index
    %c0_20 = arith.constant 0 : index
    %c0_21 = arith.constant 0 : index
    %20 = vector.load %arg6[%c0_19, %c0_20, %c0_21] : memref<1x16x128xf32, #tpu.memory_space<vmem>>, vector<1x16x128xf32>
    %21 = vector.shape_cast %20 : vector<1x16x128xf32> to vector<16x128xf32>
    %22 = vector.shape_cast %19 : vector<16x128xf32> to vector<1x16x128xf32>
    tpu.vector_store %arg6[%c0_19, %c0_20, %c0_21], %22 {strides = array<i32>} : memref<1x16x128xf32, #tpu.memory_space<vmem>>, vector<1x16x128xf32>,
    %cst_22 = arith.constant dense<0.000000e+00> : vector<128xf32>
    %23 = vector.multi_reduction <add>, %19, %cst_22 [0] : vector<16x128xf32> to vector<128xf32>
    %24 = vector.shape_cast %23 : vector<128xf32> to vector<1x128xf32>
    %c0_23 = arith.constant 0 : index
    %c0_24 = arith.constant 0 : index
    %c0_25 = arith.constant 0 : index
    %25 = vector.load %arg7[%c0_23, %c0_24, %c0_25] : memref<1x1x128xf32, #tpu.memory_space<vmem>>, vector<1x1x128xf32>
    %26 = vector.shape_cast %25 : vector<1x1x128xf32> to vector<1x128xf32>
    %27 = vector.shape_cast %24 : vector<1x128xf32> to vector<1x1x128xf32>
    tpu.vector_store %arg7[%c0_23, %c0_24, %c0_25], %27 {strides = array<i32>} : memref<1x1x128xf32, #tpu.memory_space<vmem>>, vector<1x1x128xf32>,
    %28 = arith.mulf %19, %19 : vector<16x128xf32>
    %cst_26 = arith.constant dense<0.000000e+00> : vector<128xf32>
    %29 = vector.multi_reduction <add>, %28, %cst_26 [0] : vector<16x128xf32> to vector<128xf32>
    %30 = vector.shape_cast %29 : vector<128xf32> to vector<1x128xf32>
    %c0_27 = arith.constant 0 : index
    %c0_28 = arith.constant 0 : index
    %c0_29 = arith.constant 0 : index
    %31 = vector.load %arg8[%c0_27, %c0_28, %c0_29] : memref<1x1x128xf32, #tpu.memory_space<vmem>>, vector<1x1x128xf32>
    %32 = vector.shape_cast %31 : vector<1x1x128xf32> to vector<1x128xf32>
    %33 = vector.shape_cast %30 : vector<1x128xf32> to vector<1x1x128xf32>
    tpu.vector_store %arg8[%c0_27, %c0_28, %c0_29], %33 {strides = array<i32>} : memref<1x1x128xf32, #tpu.memory_space<vmem>>, vector<1x1x128xf32>,
    return
  }
  func.func @transform_0(%arg0: i32) -> (i32, i32, i32) {
    %c0_i32 = arith.constant 0 : i32
    %c0_i32_0 = arith.constant 0 : i32
    %c0_i32_1 = arith.constant 0 : i32
    return %arg0, %c0_i32, %c0_i32_0 : i32, i32, i32
  }
  func.func @transform_1(%arg0: i32) -> (i32, i32, i32) {
    %c0_i32 = arith.constant 0 : i32
    %c0_i32_0 = arith.constant 0 : i32
    %c0_i32_1 = arith.constant 0 : i32
    %c0_i32_2 = arith.constant 0 : i32
    return %c0_i32, %c0_i32_0, %c0_i32_1 : i32, i32, i32
  }
  func.func @transform_2(%arg0: i32) -> (i32, i32) {
    %c0_i32 = arith.constant 0 : i32
    %c0_i32_0 = arith.constant 0 : i32
    %c0_i32_1 = arith.constant 0 : i32
    return %c0_i32, %c0_i32_0 : i32, i32
  }
  func.func @transform_3(%arg0: i32) -> (i32, i32) {
    %c0_i32 = arith.constant 0 : i32
    %c0_i32_0 = arith.constant 0 : i32
    %c0_i32_1 = arith.constant 0 : i32
    return %c0_i32, %c0_i32_0 : i32, i32
  }
  func.func @transform_4(%arg0: i32) -> (i32, i32) {
    %c0_i32 = arith.constant 0 : i32
    %c0_i32_0 = arith.constant 0 : i32
    %c0_i32_1 = arith.constant 0 : i32
    return %c0_i32, %c0_i32_0 : i32, i32
  }
  func.func @transform_5(%arg0: i32) -> (i32, i32, i32) {
    %c0_i32 = arith.constant 0 : i32
    %c0_i32_0 = arith.constant 0 : i32
    %c0_i32_1 = arith.constant 0 : i32
    return %arg0, %c0_i32, %c0_i32_0 : i32, i32, i32
  }
  func.func @transform_6(%arg0: i32) -> (i32, i32, i32) {
    %c0_i32 = arith.constant 0 : i32
    %c0_i32_0 = arith.constant 0 : i32
    %c0_i32_1 = arith.constant 0 : i32
    return %arg0, %c0_i32, %c0_i32_0 : i32, i32, i32
  }
  func.func @transform_7(%arg0: i32) -> (i32, i32, i32) {
    %c0_i32 = arith.constant 0 : i32
    %c0_i32_0 = arith.constant 0 : i32
    %c0_i32_1 = arith.constant 0 : i32
    return %arg0, %c0_i32, %c0_i32_0 : i32, i32, i32
  }
}

module attributes {stable_mosaic.version = 11 : i64} {
  func.func @bn_relu_conv2_kernel(%arg0: i32, %arg1: memref<1x16x128xf32, #tpu.memory_space<vmem>>, %arg2: memref<1x128xf32, #tpu.memory_space<vmem>>, %arg3: memref<1x128xf32, #tpu.memory_space<vmem>>, %arg4: memref<3x128x128xf32, #tpu.memory_space<vmem>>, %arg5: memref<1x128xf32, #tpu.memory_space<vmem>>, %arg6: memref<16x16xf32, #tpu.memory_space<vmem>>, %arg7: memref<16x16xf32, #tpu.memory_space<vmem>>, %arg8: memref<1x16x128xf32, #tpu.memory_space<vmem>>) attributes {dimension_semantics = [#tpu.dimension_semantics<parallel>], iteration_bounds = array<i64: 2>, scalar_prefetch = 0 : i64, scratch_operands = 0 : i64, tpu.core_type = #tpu.core_type<tc>, window_params = [{transform_indices = @transform_0, window_bounds = array<i64: 1, 16, 128>}, {pipeline_mode = #tpu.pipeline_mode<synchronous>, transform_indices = @transform_1, window_bounds = array<i64: 1, 128>}, {pipeline_mode = #tpu.pipeline_mode<synchronous>, transform_indices = @transform_2, window_bounds = array<i64: 1, 128>}, {pipeline_mode = #tpu.pipeline_mode<synchronous>, transform_indices = @transform_3, window_bounds = array<i64: 3, 128, 128>}, {pipeline_mode = #tpu.pipeline_mode<synchronous>, transform_indices = @transform_4, window_bounds = array<i64: 1, 128>}, {pipeline_mode = #tpu.pipeline_mode<synchronous>, transform_indices = @transform_5, window_bounds = array<i64: 16, 16>}, {pipeline_mode = #tpu.pipeline_mode<synchronous>, transform_indices = @transform_6, window_bounds = array<i64: 16, 16>}, {transform_indices = @transform_7, window_bounds = array<i64: 1, 16, 128>}]} {
    %c0 = arith.constant 0 : index
    %c0_0 = arith.constant 0 : index
    %c0_1 = arith.constant 0 : index
    %0 = vector.load %arg1[%c0, %c0_0, %c0_1] : memref<1x16x128xf32, #tpu.memory_space<vmem>>, vector<1x16x128xf32>
    %1 = vector.shape_cast %0 : vector<1x16x128xf32> to vector<16x128xf32>
    %c0_2 = arith.constant 0 : index
    %c0_3 = arith.constant 0 : index
    %2 = vector.load %arg2[%c0_2, %c0_3] : memref<1x128xf32, #tpu.memory_space<vmem>>, vector<1x128xf32>
    %3 = vector.broadcast %2 : vector<1x128xf32> to vector<16x128xf32>
    %4 = arith.mulf %1, %3 : vector<16x128xf32>
    %c0_4 = arith.constant 0 : index
    %c0_5 = arith.constant 0 : index
    %5 = vector.load %arg3[%c0_4, %c0_5] : memref<1x128xf32, #tpu.memory_space<vmem>>, vector<1x128xf32>
    %6 = vector.broadcast %5 : vector<1x128xf32> to vector<16x128xf32>
    %7 = arith.addf %4, %6 : vector<16x128xf32>
    %cst = arith.constant 0.000000e+00 : f32
    %8 = vector.broadcast %cst : f32 to vector<16x128xf32>
    %9 = arith.maximumf %7, %8 : vector<16x128xf32>
    %c0_6 = arith.constant 0 : index
    %c0_7 = arith.constant 0 : index
    %10 = vector.load %arg6[%c0_6, %c0_7] : memref<16x16xf32, #tpu.memory_space<vmem>>, vector<16x16xf32>
    %c0_8 = arith.constant 0 : index
    %c0_9 = arith.constant 0 : index
    %11 = vector.load %arg7[%c0_8, %c0_9] : memref<16x16xf32, #tpu.memory_space<vmem>>, vector<16x16xf32>
    %c0_10 = arith.constant 0 : index
    %c0_11 = arith.constant 0 : index
    %c0_12 = arith.constant 0 : index
    %12 = vector.load %arg4[%c0_10, %c0_11, %c0_12] : memref<3x128x128xf32, #tpu.memory_space<vmem>>, vector<1x128x128xf32>
    %13 = vector.shape_cast %12 : vector<1x128x128xf32> to vector<128x128xf32>
    %cst_13 = arith.constant dense<0.000000e+00> : vector<16x128xf32>
    %14 = tpu.matmul %9, %13, %cst_13 {dimension_numbers = #tpu.dot_dimension_numbers<[1], [0], [0], [1], [0, 0, 1, 1], [], []>} : vector<16x128xf32>, vector<128x128xf32>, vector<16x128xf32> -> vector<16x128xf32>
    %c1 = arith.constant 1 : index
    %c0_14 = arith.constant 0 : index
    %c0_15 = arith.constant 0 : index
    %15 = vector.load %arg4[%c1, %c0_14, %c0_15] : memref<3x128x128xf32, #tpu.memory_space<vmem>>, vector<1x128x128xf32>
    %16 = vector.shape_cast %15 : vector<1x128x128xf32> to vector<128x128xf32>
    %cst_16 = arith.constant dense<0.000000e+00> : vector<16x128xf32>
    %17 = tpu.matmul %9, %16, %cst_16 {dimension_numbers = #tpu.dot_dimension_numbers<[1], [0], [0], [1], [0, 0, 1, 1], [], []>} : vector<16x128xf32>, vector<128x128xf32>, vector<16x128xf32> -> vector<16x128xf32>
    %c2 = arith.constant 2 : index
    %c0_17 = arith.constant 0 : index
    %c0_18 = arith.constant 0 : index
    %18 = vector.load %arg4[%c2, %c0_17, %c0_18] : memref<3x128x128xf32, #tpu.memory_space<vmem>>, vector<1x128x128xf32>
    %19 = vector.shape_cast %18 : vector<1x128x128xf32> to vector<128x128xf32>
    %cst_19 = arith.constant dense<0.000000e+00> : vector<16x128xf32>
    %20 = tpu.matmul %9, %19, %cst_19 {dimension_numbers = #tpu.dot_dimension_numbers<[1], [0], [0], [1], [0, 0, 1, 1], [], []>} : vector<16x128xf32>, vector<128x128xf32>, vector<16x128xf32> -> vector<16x128xf32>
    %cst_20 = arith.constant dense<0.000000e+00> : vector<16x128xf32>
    %21 = tpu.matmul %10, %14, %cst_20 {dimension_numbers = #tpu.dot_dimension_numbers<[1], [0], [0], [1], [0, 0, 1, 1], [], []>} : vector<16x16xf32>, vector<16x128xf32>, vector<16x128xf32> -> vector<16x128xf32>
    %22 = arith.addf %17, %21 : vector<16x128xf32>
    %cst_21 = arith.constant dense<0.000000e+00> : vector<16x128xf32>
    %23 = tpu.matmul %11, %20, %cst_21 {dimension_numbers = #tpu.dot_dimension_numbers<[1], [0], [0], [1], [0, 0, 1, 1], [], []>} : vector<16x16xf32>, vector<16x128xf32>, vector<16x128xf32> -> vector<16x128xf32>
    %24 = arith.addf %22, %23 : vector<16x128xf32>
    %c0_22 = arith.constant 0 : index
    %c0_23 = arith.constant 0 : index
    %25 = vector.load %arg5[%c0_22, %c0_23] : memref<1x128xf32, #tpu.memory_space<vmem>>, vector<1x128xf32>
    %26 = vector.broadcast %25 : vector<1x128xf32> to vector<16x128xf32>
    %27 = arith.addf %24, %26 : vector<16x128xf32>
    %c0_24 = arith.constant 0 : index
    %c0_25 = arith.constant 0 : index
    %c0_26 = arith.constant 0 : index
    %28 = vector.load %arg8[%c0_24, %c0_25, %c0_26] : memref<1x16x128xf32, #tpu.memory_space<vmem>>, vector<1x16x128xf32>
    %29 = vector.shape_cast %28 : vector<1x16x128xf32> to vector<16x128xf32>
    %30 = vector.shape_cast %27 : vector<16x128xf32> to vector<1x16x128xf32>
    tpu.vector_store %arg8[%c0_24, %c0_25, %c0_26], %30 {strides = array<i32>} : memref<1x16x128xf32, #tpu.memory_space<vmem>>, vector<1x16x128xf32>,
    return
  }
  func.func @transform_0(%arg0: i32) -> (i32, i32, i32) {
    %c0_i32 = arith.constant 0 : i32
    %c0_i32_0 = arith.constant 0 : i32
    %c0_i32_1 = arith.constant 0 : i32
    return %arg0, %c0_i32, %c0_i32_0 : i32, i32, i32
  }
  func.func @transform_1(%arg0: i32) -> (i32, i32) {
    %c0_i32 = arith.constant 0 : i32
    %c0_i32_0 = arith.constant 0 : i32
    %c0_i32_1 = arith.constant 0 : i32
    return %c0_i32, %c0_i32_0 : i32, i32
  }
  func.func @transform_2(%arg0: i32) -> (i32, i32) {
    %c0_i32 = arith.constant 0 : i32
    %c0_i32_0 = arith.constant 0 : i32
    %c0_i32_1 = arith.constant 0 : i32
    return %c0_i32, %c0_i32_0 : i32, i32
  }
  func.func @transform_3(%arg0: i32) -> (i32, i32, i32) {
    %c0_i32 = arith.constant 0 : i32
    %c0_i32_0 = arith.constant 0 : i32
    %c0_i32_1 = arith.constant 0 : i32
    %c0_i32_2 = arith.constant 0 : i32
    return %c0_i32, %c0_i32_0, %c0_i32_1 : i32, i32, i32
  }
  func.func @transform_4(%arg0: i32) -> (i32, i32) {
    %c0_i32 = arith.constant 0 : i32
    %c0_i32_0 = arith.constant 0 : i32
    %c0_i32_1 = arith.constant 0 : i32
    return %c0_i32, %c0_i32_0 : i32, i32
  }
  func.func @transform_5(%arg0: i32) -> (i32, i32) {
    %c0_i32 = arith.constant 0 : i32
    %c0_i32_0 = arith.constant 0 : i32
    %c0_i32_1 = arith.constant 0 : i32
    return %c0_i32, %c0_i32_0 : i32, i32
  }
  func.func @transform_6(%arg0: i32) -> (i32, i32) {
    %c0_i32 = arith.constant 0 : i32
    %c0_i32_0 = arith.constant 0 : i32
    %c0_i32_1 = arith.constant 0 : i32
    return %c0_i32, %c0_i32_0 : i32, i32
  }
  func.func @transform_7(%arg0: i32) -> (i32, i32, i32) {
    %c0_i32 = arith.constant 0 : i32
    %c0_i32_0 = arith.constant 0 : i32
    %c0_i32_1 = arith.constant 0 : i32
    return %arg0, %c0_i32, %c0_i32_0 : i32, i32, i32
  }
}

</mosaic_0001>

<llo_original>
// kernel: tile.23
$region0: #{tile.23}
  #allocation0 [shape = 's32[1]{0}', space=sflag, size = 0x4, scoped, tag = 'scoped memory for tile.23']
  %s0 = inlined_call_operand.vmem [shape: f32[8], index: 0, kind: input, shape index: {}]
  %s1 = inlined_call_operand.vmem [shape: f32[16,8], index: 1, kind: output, shape index: {}]
  // Predicated region
  $region2: #{tile.23} parent=0 // pred_check
    _
  $region3: #{tile.23} parent=0 // pred_check_branch
    %3 = sbr.rel (0) target = $region5
  $region4: #{tile.23} parent=0 // pred_region
    _
  $region5: #{tile.23} parent=0 // pred_fallthru
    _
  %v4 = vld [vmem:[%s0] ss:$0 sm:$0xff]
  %5 = vst [vmem:[%s1] sm:$0xff] %v4
  %s6 = scalar_lea.vmem %s1, 8
  %7 = vst [vmem:[%s6] sm:$0xff] %v4

// kernel: tile.24
$region0: #{tile.24}
  %s0 = inlined_call_operand.vmem [shape: f32[16,8], index: 0, kind: input, shape index: {}]
  %s1 = inlined_call_operand.vmem [shape: f32[1,128], index: 1, kind: output, shape index: {}]
  $region1: #{tile.24} parent=0
    #allocation0 [shape = 'u8[4096]{0}', space=vmem, size = 0x1000, scoped, tag = 'scoped mem for output reshape']
    %v2 = vld [vmem:[%s0] sm:$0x1]
    %vm3 = vcmask 64512
    %4 = vst.msk [vmem:[#allocation0] sm:$0x1] %vm3, %v2
    %s5 = scalar_lea.vmem %s0, 15
    %v6 = vld [vmem:[%s5] sm:$0x1]
    %7 = vrot.lane.b32.xlu0 %v6, 120
    %v8 = vpop.permute.xlu0 %7
    %vm9 = vcmask 1048512
    %10 = vst.msk [vmem:[#allocation0] sm:$0x1] %vm9, %v8
    %s11 = scalar_lea.vmem %s0, 14
    %v12 = vld [vmem:[%s11] sm:$0x1]
    %13 = vrot.lane.b32.xlu0 %v12, 112
    %v14 = vpop.permute.xlu0 %13
    %vm15 = vcmask 982912
    %16 = vst.msk [vmem:[#allocation0] sm:$0x1] %vm15, %v14
    %s17 = scalar_lea.vmem %s0, 13
    %v18 = vld [vmem:[%s17] sm:$0x1]
    %19 = vrot.lane.b32.xlu0 %v18, 104
    %v20 = vpop.permute.xlu0 %19
    %vm21 = vcmask 917312
    %22 = vst.msk [vmem:[#allocation0] sm:$0x1] %vm21, %v20
    %s23 = scalar_lea.vmem %s0, 12
    %v24 = vld [vmem:[%s23] sm:$0x1]
    %25 = vrot.lane.b32.xlu0 %v24, 96
    %v26 = vpop.permute.xlu0 %25
    %vm27 = vcmask 851712
    %28 = vst.msk [vmem:[#allocation0] sm:$0x1] %vm27, %v26
    %s29 = scalar_lea.vmem %s0, 11
    %v30 = vld [vmem:[%s29] sm:$0x1]
    %31 = vrot.lane.b32.xlu0 %v30, 88
    %v32 = vpop.permute.xlu0 %31
    %vm33 = vcmask 786112
    %34 = vst.msk [vmem:[#allocation0] sm:$0x1] %vm33, %v32
    %s35 = scalar_lea.vmem %s0, 10
    %v36 = vld [vmem:[%s35] sm:$0x1]
    %37 = vrot.lane.b32.xlu0 %v36, 80
    %v38 = vpop.permute.xlu0 %37
    %vm39 = vcmask 720512
    %40 = vst.msk [vmem:[#allocation0] sm:$0x1] %vm39, %v38
    %s41 = scalar_lea.vmem %s0, 9
    %v42 = vld [vmem:[%s41] sm:$0x1]
    %43 = vrot.lane.b32.xlu0 %v42, 72
    %v44 = vpop.permute.xlu0 %43
    %vm45 = vcmask 654912
    %46 = vst.msk [vmem:[#allocation0] sm:$0x1] %vm45, %v44
    %s47 = scalar_lea.vmem %s0, 8
    %v48 = vld [vmem:[%s47] sm:$0x1]
    %49 = vrot.lane.b32.xlu0 %v48, 64
    %v50 = vpop.permute.xlu0 %49
    %vm51 = vcmask 589312
    %52 = vst.msk [vmem:[#allocation0] sm:$0x1] %vm51, %v50
    %s53 = scalar_lea.vmem %s0, 7
    %v54 = vld [vmem:[%s53] sm:$0x1]
    %55 = vrot.lane.b32.xlu0 %v54, 56
    %v56 = vpop.permute.xlu0 %55
    %vm57 = vcmask 523712
    %58 = vst.msk [vmem:[#allocation0] sm:$0x1] %vm57, %v56
    %s59 = scalar_lea.vmem %s0, 6
    %v60 = vld [vmem:[%s59] sm:$0x1]
    %61 = vrot.lane.b32.xlu0 %v60, 48
    %v62 = vpop.permute.xlu0 %61
    %vm63 = vcmask 458112
    %64 = vst.msk [vmem:[#allocation0] sm:$0x1] %vm63, %v62
    %s65 = scalar_lea.vmem %s0, 5
    %v66 = vld [vmem:[%s65] sm:$0x1]
    %67 = vrot.lane.b32.xlu0 %v66, 40
    %v68 = vpop.permute.xlu0 %67
    %vm69 = vcmask 392512
    %70 = vst.msk [vmem:[#allocation0] sm:$0x1] %vm69, %v68
    %s71 = scalar_lea.vmem %s0, 4
    %v72 = vld [vmem:[%s71] sm:$0x1]
    %73 = vrot.lane.b32.xlu0 %v72, 32
    %v74 = vpop.permute.xlu0 %73
    %vm75 = vcmask 326912
    %76 = vst.msk [vmem:[#allocation0] sm:$0x1] %vm75, %v74
    %s77 = scalar_lea.vmem %s0, 3
    %v78 = vld [vmem:[%s77] sm:$0x1]
    %79 = vrot.lane.b32.xlu0 %v78, 24
    %v80 = vpop.permute.xlu0 %79
    %vm81 = vcmask 261312
    %82 = vst.msk [vmem:[#allocation0] sm:$0x1] %vm81, %v80
    %s83 = scalar_lea.vmem %s0, 2
    %v84 = vld [vmem:[%s83] sm:$0x1]
    %85 = vrot.lane.b32.xlu0 %v84, 16
    %v86 = vpop.permute.xlu0 %85
    %vm87 = vcmask 195712
    %88 = vst.msk [vmem:[#allocation0] sm:$0x1] %vm87, %v86
    %s89 = scalar_lea.vmem %s0, 1
    %v90 = vld [vmem:[%s89] sm:$0x1]
    %91 = vrot.lane.b32.xlu0 %v90, 8
    %v92 = vpop.permute.xlu0 %91
    %vm93 = vcmask 130112
    %94 = vst.msk [vmem:[#allocation0] sm:$0x1] %vm93, %v92
    %s96 = sshllo.u32 0, 1
    %v98 = vld [vmem:[#allocation0] sm:%s96]
    %s99 = sshllo.u32 0, 1
    %100 = vst [vmem:[%s1] sm:%s99] %v98

// kernel: conv_ycf_forward.2
$region0: #{conv_ycf_forward.2}
  #allocation0 [shape = 'u32[]', space=smem, size = 0x4, offset = 0x4, fixed_abs, tag = 'smem constant byte address 0x4 - core index']
  #allocation1 [shape = 'u32[144,128]{1,0:T(1,128)}', space=vmem, size = 0x12000, scoped, tag = 'internal scratch']
  %s0 = inlined_call_operand.vmem [shape: f32[2,16,64], index: 0, kind: input, shape index: {}]
  %s1 = inlined_call_operand.vmem [shape: f32[3,64,128], index: 1, kind: input, shape index: {}]
  %s2 = inlined_call_operand.vmem [shape: f32[1,128], index: 2, kind: input, shape index: {}]
  %s3 = inlined_call_operand.vmem [shape: f32[16,16], index: 3, kind: input, shape index: {}]
  %s4 = inlined_call_operand.vmem [shape: f32[16,16], index: 4, kind: input, shape index: {}]
  %s5 = inlined_call_operand.vmem [shape: f32[2,16,128], index: 5, kind: output, shape index: {0}]
  %s6 = inlined_call_operand.vmem [shape: f32[2,1,128], index: 6, kind: output, shape index: {1}]
  %s7 = inlined_call_operand.vmem [shape: f32[2,1,128], index: 7, kind: output, shape index: {2}]
  %8 = xla_tuple %s5, %s6, %s7
  %s9 = sld [smem:[#allocation0]]
  $region69: #{conv_ycf_forward.2} parent=0
    _
  %s11 = ssub.s32 1, %s9
  %s12 = scalar_select 0, %s11, %s9
  loop: start=0, step=1, limit=4
  $region2: #{conv_ycf_forward.2} parent=0 // loop_pre_header
    _
  $region3: #{conv_ycf_forward.2} parent=0 // loop_header
    %s14 = sphi 0, %s18
    %p15 = scmp.ge.s32.totalorder %s14, 4
    %s24 = sphi 0, %s26
    %s27 = sphi 0, %s24
    %s28 = sphi 0, %s27
    %s44 = sphi 0, %s28
    %s48 = sphi 0, %s48
    %s50 = sphi 0, %s48
    %s51 = sphi 0, %s50
    %s65 = sphi 0, %s51
    %s69 = sphi 0, %s69
    %s71 = sphi 0, %s69
    %s72 = sphi 0, %s71
    %s86 = sphi 0, %s72
    %s90 = sphi 0, %s90
    %s92 = sphi 0, %s90
    %s93 = sphi 0, %s92
    %s107 = sphi 0, %s93
    %s111 = sphi 0, %s111
    %s113 = sphi 0, %s111
    %s114 = sphi 0, %s113
    %s128 = sphi 0, %s114
    %s134 = sphi 0, %s136
    %s137 = sphi 0, %s134
    %s138 = sphi 0, %s137
    %s154 = sphi 0, %s138
    %s160 = sphi 0, %s162
    %s163 = sphi 0, %s160
    %s164 = sphi 0, %s163
    %s180 = sphi 0, %s164
    %s186 = sphi 0, %s188
    %s189 = sphi 0, %s186
    %s190 = sphi 0, %s189
    %s206 = sphi 0, %s190
  $region4: #{conv_ycf_forward.2} parent=0 // loop_header_branch
    %17 = sbr.rel (%p15) target = $region8
  $region5: #{conv_ycf_forward.2} parent=0 // loop_body
    %s19 = ssub.s32 %s14, 1
    %s20 = ssub.s32 %s14, 2
    %s21 = sadd.s32 %s14, 1
    %s22 = ssub.s32 %s14, %s21
    %p23 = scmp.eq.s32.totalorder %s22, 0
    %s25 = sadd.s32 %s24, 1
    %s26 = scalar_select %p23, %s24, %s25
    %p29 = pneg %p23
    %p30 = scmp.eq.s32.totalorder %s14, 1
    %p31 = por %p29, %p30
    %p32 = scmp.ne.s32.totalorder %s24, %s27
    %p33 = scmp.eq.s32.totalorder %s14, 0
    %p34 = por %p32, %p33
    %p35 = scmp.ne.s32.totalorder %s24, %s27
    %p36 = scmp.eq.s32.totalorder %s19, 1
    %p37 = por %p35, %p36
    %p38 = scmp.ne.s32.totalorder %s27, %s28
    %p39 = scmp.eq.s32.totalorder %s19, 0
    %p40 = por %p38, %p39
    %p41 = scmp.ne.s32.totalorder %s27, %s28
    %p42 = scmp.eq.s32.totalorder %s20, 1
    %p43 = por %p41, %p42
    %p45 = scmp.ne.s32.totalorder %s28, %s44
    %p46 = scmp.eq.s32.totalorder %s20, 0
    %p47 = por %p45, %p46
    %s49 = sadd.s32 %s48, 1
    %p52 = scmp.eq.s32.totalorder %s14, 1
    %p53 = scmp.ne.s32.totalorder %s48, %s50
    %p54 = scmp.eq.s32.totalorder %s14, 0
    %p55 = por %p53, %p54
    %p56 = scmp.ne.s32.totalorder %s48, %s50
    %p57 = scmp.eq.s32.totalorder %s19, 1
    %p58 = por %p56, %p57
    %p59 = scmp.ne.s32.totalorder %s50, %s51
    %p60 = scmp.eq.s32.totalorder %s19, 0
    %p61 = por %p59, %p60
    %p62 = scmp.ne.s32.totalorder %s50, %s51
    %p63 = scmp.eq.s32.totalorder %s20, 1
    %p64 = por %p62, %p63
    %p66 = scmp.ne.s32.totalorder %s51, %s65
    %p67 = scmp.eq.s32.totalorder %s20, 0
    %p68 = por %p66, %p67
    %s70 = sadd.s32 %s69, 1
    %p73 = scmp.eq.s32.totalorder %s14, 1
    %p74 = scmp.ne.s32.totalorder %s69, %s71
    %p75 = scmp.eq.s32.totalorder %s14, 0
    %p76 = por %p74, %p75
    %p77 = scmp.ne.s32.totalorder %s69, %s71
    %p78 = scmp.eq.s32.totalorder %s19, 1
    %p79 = por %p77, %p78
    %p80 = scmp.ne.s32.totalorder %s71, %s72
    %p81 = scmp.eq.s32.totalorder %s19, 0
    %p82 = por %p80, %p81
    %p83 = scmp.ne.s32.totalorder %s71, %s72
    %p84 = scmp.eq.s32.totalorder %s20, 1
    %p85 = por %p83, %p84
    %p87 = scmp.ne.s32.totalorder %s72, %s86
    %p88 = scmp.eq.s32.totalorder %s20, 0
    %p89 = por %p87, %p88
    %s91 = sadd.s32 %s90, 1
    %p94 = scmp.eq.s32.totalorder %s14, 1
    %p95 = scmp.ne.s32.totalorder %s90, %s92
    %p96 = scmp.eq.s32.totalorder %s14, 0
    %p97 = por %p95, %p96
    %p98 = scmp.ne.s32.totalorder %s90, %s92
    %p99 = scmp.eq.s32.totalorder %s19, 1
    %p100 = por %p98, %p99
    %p101 = scmp.ne.s32.totalorder %s92, %s93
    %p102 = scmp.eq.s32.totalorder %s19, 0
    %p103 = por %p101, %p102
    %p104 = scmp.ne.s32.totalorder %s92, %s93
    %p105 = scmp.eq.s32.totalorder %s20, 1
    %p106 = por %p104, %p105
    %p108 = scmp.ne.s32.totalorder %s93, %s107
    %p109 = scmp.eq.s32.totalorder %s20, 0
    %p110 = por %p108, %p109
    %s112 = sadd.s32 %s111, 1
    %p115 = scmp.eq.s32.totalorder %s14, 1
    %p116 = scmp.ne.s32.totalorder %s111, %s113
    %p117 = scmp.eq.s32.totalorder %s14, 0
    %p118 = por %p116, %p117
    %p119 = scmp.ne.s32.totalorder %s111, %s113
    %p120 = scmp.eq.s32.totalorder %s19, 1
    %p121 = por %p119, %p120
    %p122 = scmp.ne.s32.totalorder %s113, %s114
    %p123 = scmp.eq.s32.totalorder %s19, 0
    %p124 = por %p122, %p123
    %p125 = scmp.ne.s32.totalorder %s113, %s114
    %p126 = scmp.eq.s32.totalorder %s20, 1
    %p127 = por %p125, %p126
    %p129 = scmp.ne.s32.totalorder %s114, %s128
    %p130 = scmp.eq.s32.totalorder %s20, 0
    %p131 = por %p129, %p130
    %s132 = ssub.s32 %s14, %s21
    %p133 = scmp.eq.s32.totalorder %s132, 0
    %s135 = sadd.s32 %s134, 1
    %s136 = scalar_select %p133, %s134, %s135
    %p139 = pneg %p133
    %p140 = scmp.eq.s32.totalorder %s14, 1
    %p141 = por %p139, %p140
    %p142 = scmp.ne.s32.totalorder %s134, %s137
    %p143 = scmp.eq.s32.totalorder %s14, 0
    %p144 = por %p142, %p143
    %p145 = scmp.ne.s32.totalorder %s134, %s137
    %p146 = scmp.eq.s32.totalorder %s19, 1
    %p147 = por %p145, %p146
    %p148 = scmp.ne.s32.totalorder %s137, %s138
    %p149 = scmp.eq.s32.totalorder %s19, 0
    %p150 = por %p148, %p149
    %p151 = scmp.ne.s32.totalorder %s137, %s138
    %p152 = scmp.eq.s32.totalorder %s20, 1
    %p153 = por %p151, %p152
    %p155 = scmp.ne.s32.totalorder %s138, %s154
    %p156 = scmp.eq.s32.totalorder %s20, 0
    %p157 = por %p155, %p156
    %s158 = ssub.s32 %s14, %s21
    %p159 = scmp.eq.s32.totalorder %s158, 0
    %s161 = sadd.s32 %s160, 1
    %s162 = scalar_select %p159, %s160, %s161
    %p165 = pneg %p159
    %p166 = scmp.eq.s32.totalorder %s14, 1
    %p167 = por %p165, %p166
    %p168 = scmp.ne.s32.totalorder %s160, %s163
    %p169 = scmp.eq.s32.totalorder %s14, 0
    %p170 = por %p168, %p169
    %p171 = scmp.ne.s32.totalorder %s160, %s163
    %p172 = scmp.eq.s32.totalorder %s19, 1
    %p173 = por %p171, %p172
    %p174 = scmp.ne.s32.totalorder %s163, %s164
    %p175 = scmp.eq.s32.totalorder %s19, 0
    %p176 = por %p174, %p175
    %p177 = scmp.ne.s32.totalorder %s163, %s164
    %p178 = scmp.eq.s32.totalorder %s20, 1
    %p179 = por %p177, %p178
    %p181 = scmp.ne.s32.totalorder %s164, %s180
    %p182 = scmp.eq.s32.totalorder %s20, 0
    %p183 = por %p181, %p182
    %s184 = ssub.s32 %s14, %s21
    %p185 = scmp.eq.s32.totalorder %s184, 0
    %s187 = sadd.s32 %s186, 1
    %s188 = scalar_select %p185, %s186, %s187
    %p191 = pneg %p185
    %p192 = scmp.eq.s32.totalorder %s14, 1
    %p193 = por %p191, %p192
    %p194 = scmp.ne.s32.totalorder %s186, %s189
    %p195 = scmp.eq.s32.totalorder %s14, 0
    %p196 = por %p194, %p195
    %p197 = scmp.ne.s32.totalorder %s186, %s189
    %p198 = scmp.eq.s32.totalorder %s19, 1
    %p199 = por %p197, %p198
    %p200 = scmp.ne.s32.totalorder %s189, %s190
    %p201 = scmp.eq.s32.totalorder %s19, 0
    %p202 = por %p200, %p201
    %p203 = scmp.ne.s32.totalorder %s189, %s190
    %p204 = scmp.eq.s32.totalorder %s20, 1
    %p205 = por %p203, %p204
    %p207 = scmp.ne.s32.totalorder %s190, %s206
    %p208 = scmp.eq.s32.totalorder %s20, 0
    %p209 = por %p207, %p208
    %p210 = scmp.le.s32.totalorder 1, %s14
    %p211 = scmp.lt.s32.totalorder %s14, 3
    %p212 = pnand %p210, %p211
    %p213 = pneg %p212
    // Predicated region
    $region9: #{conv_ycf_forward.2} parent=5 // pred_check
      _
    $region10: #{conv_ycf_forward.2} parent=5 // pred_check_branch
      %215 = sbr.rel (%p212) target = $region12
    $region11: #{conv_ycf_forward.2} parent=5 // pred_region
      %s216 = ssub.s32 %s14, 1
      // Predicated region
      $region13: #{conv_ycf_forward.2} parent=11 // pred_check
        %p217 = pneg %p61
      $region14: #{conv_ycf_forward.2} parent=11 // pred_check_branch
        %219 = sbr.rel (%p217) target = $region16
      $region15: #{conv_ycf_forward.2} parent=11 // pred_region
        _
      $region16: #{conv_ycf_forward.2} parent=11 // pred_fallthru
        _
      // Predicated region
      $region17: #{conv_ycf_forward.2} parent=11 // pred_check
        %p220 = pneg %p82
      $region18: #{conv_ycf_forward.2} parent=11 // pred_check_branch
        %222 = sbr.rel (%p220) target = $region20
      $region19: #{conv_ycf_forward.2} parent=11 // pred_region
        _
      $region20: #{conv_ycf_forward.2} parent=11 // pred_fallthru
        _
      // Predicated region
      $region21: #{conv_ycf_forward.2} parent=11 // pred_check
        %p223 = pneg %p103
      $region22: #{conv_ycf_forward.2} parent=11 // pred_check_branch
        %225 = sbr.rel (%p223) target = $region24
      $region23: #{conv_ycf_forward.2} parent=11 // pred_region
        _
      $region24: #{conv_ycf_forward.2} parent=11 // pred_fallthru
        _
      // Predicated region
      $region25: #{conv_ycf_forward.2} parent=11 // pred_check
        %p226 = pneg %p124
      $region26: #{conv_ycf_forward.2} parent=11 // pred_check_branch
        %228 = sbr.rel (%p226) target = $region28
      $region27: #{conv_ycf_forward.2} parent=11 // pred_region
        _
      $region28: #{conv_ycf_forward.2} parent=11 // pred_fallthru
        _
    $region12: #{conv_ycf_forward.2} parent=5 // pred_fallthru
      _
    %p229 = scmp.lt.s32.totalorder %s14, 2
    // Predicated region
    $region29: #{conv_ycf_forward.2} parent=5 // pred_check
      %p230 = pneg %p229
    $region30: #{conv_ycf_forward.2} parent=5 // pred_check_branch
      %232 = sbr.rel (%p230) target = $region32
    $region31: #{conv_ycf_forward.2} parent=5 // pred_region
      // Predicated region
      $region33: #{conv_ycf_forward.2} parent=31 // pred_check
        %p233 = pneg %p34
      $region34: #{conv_ycf_forward.2} parent=31 // pred_check_branch
        %235 = sbr.rel (%p233) target = $region36
      $region35: #{conv_ycf_forward.2} parent=31 // pred_region
        %p236 = scmp.lt.s32.totalorder %s14, 1
        %s237 = scalar_select %p236, %s14, 1
        %s238 = smul.addr %s237, 2
        %s239 = smul.addr %s238, 8
        %s240 = scalar_lea.vmem %s0, %s239
      $region36: #{conv_ycf_forward.2} parent=31 // pred_fallthru
        _
    $region32: #{conv_ycf_forward.2} parent=5 // pred_fallthru
      _
    %p241 = scmp.le.s32.totalorder 1, %s14
    %p242 = scmp.lt.s32.totalorder %s14, 3
    %p243 = pnand %p241, %p242
    %p244 = pneg %p243
    // Predicated region
    $region37: #{conv_ycf_forward.2} parent=5 // pred_check
      _
    $region38: #{conv_ycf_forward.2} parent=5 // pred_check_branch
      %246 = sbr.rel (%p243) target = $region40
    $region39: #{conv_ycf_forward.2} parent=5 // pred_region
      %s247 = ssub.s32 %s14, 1
      %p248 = scmp.lt.s32.totalorder %s19, 1
      %s249 = scalar_select %p248, %s19, 1
      %s250 = smul.addr %s249, 2
      %s251 = smul.addr %s250, 8
      %s252 = scalar_lea.vmem %s0, %s251
      %p253 = pneg %p40
      %p254 = pneg %p37
      %p255 = pneg %p61
      %p256 = pneg %p58
      %p257 = pneg %p82
      %p258 = pneg %p79
      %p259 = pneg %p103
      %p260 = pneg %p100
      %p261 = pneg %p124
      %p262 = pneg %p121
      %p263 = pneg %p150
      %p264 = pneg %p147
      %p265 = scmp.lt.s32.totalorder %s19, 1
      %s266 = scalar_select %p265, %s19, 1
      %s267 = smul.addr %s266, 2
      %s268 = smul.addr %s267, 8
      %s269 = scalar_lea.vmem %s5, %s268
      %p270 = pneg %p176
      %p271 = pneg %p173
      %p272 = scmp.lt.s32.totalorder %s19, 1
      %s273 = scalar_select %p272, %s19, 1
      %s274 = scalar_lea.vmem %s6, %s273
      %p275 = pneg %p202
      %p276 = pneg %p199
      %p277 = scmp.lt.s32.totalorder %s19, 1
      %s278 = scalar_select %p277, %s19, 1
      %s279 = scalar_lea.vmem %s7, %s278
      %p280 = scmp.lt.s32.totalorder %s19, 1
      %s281 = scalar_select %p280, %s19, 1
      %s282 = smul.addr %s281, 2
      %s283 = smul.addr %s282, 8
      %s284 = scalar_lea.vmem %s0, %s283
      %p285 = scmp.lt.s32.totalorder %s19, 1
      %s286 = scalar_select %p285, %s19, 1
      %s287 = smul.addr %s286, 2
      %s288 = smul.addr %s287, 8
      %s289 = scalar_lea.vmem %s5, %s288
      %p290 = scmp.lt.s32.totalorder %s19, 1
      %s291 = scalar_select %p290, %s19, 1
      %s292 = scalar_lea.vmem %s6, %s291
      %p293 = scmp.lt.s32.totalorder %s19, 1
      %s294 = scalar_select %p293, %s19, 1
      %s295 = scalar_lea.vmem %s7, %s294
      %v296 = vld [vmem:[%s284] sm:$0xff]
      %v297 = vld [vmem:[%s284 + $0x8] sm:$0xff]
      %v298 = vld [vmem:[%s3] sm:$0xff]
      %v299 = vld [vmem:[%s3 + $0x8] sm:$0xff]
      %v300 = vld [vmem:[%s4] sm:$0xff]
      %v301 = vld [vmem:[%s4 + $0x8] sm:$0xff]
      %v302 = vld [vmem:[%s1] sm:$0xff]
      %v303 = vld [vmem:[%s1 + $0x8] sm:$0xff]
      %v304 = vld [vmem:[%s1 + $0x10] sm:$0xff]
      %v305 = vld [vmem:[%s1 + $0x18] sm:$0xff]
      %v306 = vld [vmem:[%s1 + $0x20] sm:$0xff]
      %v307 = vld [vmem:[%s1 + $0x28] sm:$0xff]
      %v308 = vld [vmem:[%s1 + $0x30] sm:$0xff]
      %v309 = vld [vmem:[%s1 + $0x38] sm:$0xff]
      %vm310 = vcmask 523264
      %v312 = vsel %vm310, %v296, 0
      %v315 = vsel %vm310, %v297, 0
      %317 = vmatprep.subr.mxu0 0.0
      %318 = vmatpush1.msra.mxu0 %v302
      %319 = vmatprep.subr.mxu0 0.0
      %320 = vmatpush1.msra.mxu0 %v303
      %321 = vmatprep.subr.mxu0 0.0
      %322 = vmatpush1.msra.mxu0 %v304
      %323 = vmatprep.subr.mxu0 0.0
      %324 = vmatpush1.msra.mxu0 %v305
      %325 = vmatprep.subr.mxu0 0.0
      %326 = vmatpush1.msra.mxu0 %v306
      %327 = vmatprep.subr.mxu0 0.0
      %328 = vmatpush1.msra.mxu0 %v307
      %329 = vmatprep.subr.mxu0 0.0
      %330 = vmatpush1.msra.mxu0 %v308
      %331 = vmatprep.subr.mxu0 0.0
      %332 = vmatpush1.msra.mxu0 %v309
      %333 = vmatprep.subr.mxu0 0.0
      %334 = vmatpush1.msra.mxu0 0.0
      %335 = vmatprep.subr.mxu0 0.0
      %336 = vmatpush1.msra.mxu0 0.0
      %337 = vmatprep.subr.mxu0 0.0
      %338 = vmatpush1.msra.mxu0 0.0
      %339 = vmatprep.subr.mxu0 0.0
      %340 = vmatpush1.msra.mxu0 0.0
      %341 = vmatprep.subr.mxu0 0.0
      %342 = vmatpush1.msra.mxu0 0.0
      %343 = vmatprep.subr.mxu0 0.0
      %344 = vmatpush1.msra.mxu0 0.0
      %345 = vmatprep.subr.mxu0 0.0
      %346 = vmatpush1.msra.mxu0 0.0
      %347 = vmatprep.subr.mxu0 0.0
      %348 = vmatpush1.msra.mxu0 0.0
      %349 = vmatprep.subr.mxu0 0.0
      %350 = vmatpush1.msra.mxu0 0.0
      %351 = vmatprep.subr.mxu0 0.0
      %352 = vmatpush1.msra.mxu0 0.0
      %353 = vmatprep.subr.mxu0 0.0
      %354 = vmatpush1.msra.mxu0 0.0
      %355 = vmatprep.subr.mxu0 0.0
      %356 = vmatpush1.msra.mxu0 0.0
      %357 = vmatprep.subr.mxu0 0.0
      %358 = vmatpush1.msra.mxu0 0.0
      %359 = vmatprep.subr.mxu0 0.0
      %360 = vmatpush1.msra.mxu0 0.0
      %361 = vmatprep.subr.mxu0 0.0
      %362 = vmatpush1.msra.mxu0 0.0
      %363 = vmatprep.subr.mxu0 0.0
      %364 = vmatpush1.msra.mxu0 0.0
      %365 = vmatprep.subr.mxu0 0.0
      %366 = vmatpush1.msra.mxu0 0.0
      %367 = vmatprep.subr.mxu0 0.0
      %368 = vmatpush1.msra.mxu0 0.0
      %369 = vmatprep.subr.mxu0 0.0
      %370 = vmatpush1.msra.mxu0 0.0
      %371 = vmatprep.subr.mxu0 0.0
      %372 = vmatpush1.msra.mxu0 0.0
      %373 = vmatprep.subr.mxu0 0.0
      %374 = vmatpush1.msra.mxu0 0.0
      %375 = vmatprep.subr.mxu0 0.0
      %376 = vmatpush1.msra.mxu0 0.0
      %377 = vmatprep.subr.mxu0 0.0
      %378 = vmatpush1.msra.mxu0 0.0
      %379 = vmatprep.subr.mxu0 0.0
      %380 = vmatpush1.msra.mxu0 0.0
      %381 = vmatprep.mubr.f32.mxu0 0.0
      %382 = vmatmul.mubr.f32.gmra.mrb[0].mxu0 %v312
      %v383 = vpop.f32.mrb[0].mxu0
      %v384 = vadd.f32 0.0, %v383
      %v385 = vpop.f32.mrb[0].mxu0
      %386 = vmatprep.mubr.f32.mxu0 0.0
      %387 = vmatmul.mubr.f32.gmra.mrb[0].mxu0 %v315
      %v388 = vpop.f32.mrb[0].mxu0
      %v389 = vadd.f32 0.0, %v388
      %v390 = vpop.f32.mrb[0].mxu0
      %391 = vdwg.mxu0
      %s392 = scalar_lea.vmem %s1, 64
      %v393 = vld [vmem:[%s392] sm:$0xff]
      %v394 = vld [vmem:[%s392 + $0x8] sm:$0xff]
      %v395 = vld [vmem:[%s392 + $0x10] sm:$0xff]
      %v396 = vld [vmem:[%s392 + $0x18] sm:$0xff]
      %v397 = vld [vmem:[%s392 + $0x20] sm:$0xff]
      %v398 = vld [vmem:[%s392 + $0x28] sm:$0xff]
      %v399 = vld [vmem:[%s392 + $0x30] sm:$0xff]
      %v400 = vld [vmem:[%s392 + $0x38] sm:$0xff]
      %s401 = scalar_lea.vmem %s1, 128
      %v402 = vld [vmem:[%s401] sm:$0xff]
      %v403 = vld [vmem:[%s401 + $0x8] sm:$0xff]
      %v404 = vld [vmem:[%s401 + $0x10] sm:$0xff]
      %v405 = vld [vmem:[%s401 + $0x18] sm:$0xff]
      %v406 = vld [vmem:[%s401 + $0x20] sm:$0xff]
      %v407 = vld [vmem:[%s401 + $0x28] sm:$0xff]
      %v408 = vld [vmem:[%s401 + $0x30] sm:$0xff]
      %v409 = vld [vmem:[%s401 + $0x38] sm:$0xff]
      %410 = vmatprep.subr.mxu0 0.0
      %411 = vmatpush1.msra.mxu0 %v402
      %412 = vmatprep.subr.mxu0 0.0
      %413 = vmatpush1.msra.mxu0 %v403
      %414 = vmatprep.subr.mxu0 0.0
      %415 = vmatpush1.msra.mxu0 %v404
      %416 = vmatprep.subr.mxu0 0.0
      %417 = vmatpush1.msra.mxu0 %v405
      %418 = vmatprep.subr.mxu0 0.0
      %419 = vmatpush1.msra.mxu0 %v406
      %420 = vmatprep.subr.mxu0 0.0
      %421 = vmatpush1.msra.mxu0 %v407
      %422 = vmatprep.subr.mxu0 0.0
      %423 = vmatpush1.msra.mxu0 %v408
      %424 = vmatprep.subr.mxu0 0.0
      %425 = vmatpush1.msra.mxu0 %v409
      %426 = vmatprep.subr.mxu0 0.0
      %427 = vmatpush1.msra.mxu0 0.0
      %428 = vmatprep.subr.mxu0 0.0
      %429 = vmatpush1.msra.mxu0 0.0
      %430 = vmatprep.subr.mxu0 0.0
      %431 = vmatpush1.msra.mxu0 0.0
      %432 = vmatprep.subr.mxu0 0.0
      %433 = vmatpush1.msra.mxu0 0.0
      %434 = vmatprep.subr.mxu0 0.0
      %435 = vmatpush1.msra.mxu0 0.0
      %436 = vmatprep.subr.mxu0 0.0
      %437 = vmatpush1.msra.mxu0 0.0
      %438 = vmatprep.subr.mxu0 0.0
      %439 = vmatpush1.msra.mxu0 0.0
      %440 = vmatprep.subr.mxu0 0.0
      %441 = vmatpush1.msra.mxu0 0.0
      %442 = vmatprep.subr.mxu0 0.0
      %443 = vmatpush1.msra.mxu0 0.0
      %444 = vmatprep.subr.mxu0 0.0
      %445 = vmatpush1.msra.mxu0 0.0
      %446 = vmatprep.subr.mxu0 0.0
      %447 = vmatpush1.msra.mxu0 0.0
      %448 = vmatprep.subr.mxu0 0.0
      %449 = vmatpush1.msra.mxu0 0.0
      %450 = vmatprep.subr.mxu0 0.0
      %451 = vmatpush1.msra.mxu0 0.0
      %452 = vmatprep.subr.mxu0 0.0
      %453 = vmatpush1.msra.mxu0 0.0
      %454 = vmatprep.subr.mxu0 0.0
      %455 = vmatpush1.msra.mxu0 0.0
      %456 = vmatprep.subr.mxu0 0.0
      %457 = vmatpush1.msra.mxu0 0.0
      %458 = vmatprep.subr.mxu0 0.0
      %459 = vmatpush1.msra.mxu0 0.0
      %460 = vmatprep.subr.mxu0 0.0
      %461 = vmatpush1.msra.mxu0 0.0
      %462 = vmatprep.subr.mxu0 0.0
      %463 = vmatpush1.msra.mxu0 0.0
      %464 = vmatprep.subr.mxu0 0.0
      %465 = vmatpush1.msra.mxu0 0.0
      %466 = vmatprep.subr.mxu0 0.0
      %467 = vmatpush1.msra.mxu0 0.0
      %468 = vmatprep.subr.mxu0 0.0
      %469 = vmatpush1.msra.mxu0 0.0
      %470 = vmatprep.subr.mxu0 0.0
      %471 = vmatpush1.msra.mxu0 0.0
      %472 = vmatprep.subr.mxu0 0.0
      %473 = vmatpush1.msra.mxu0 0.0
      %474 = vmatprep.mubr.f32.mxu0 0.0
      %475 = vmatmul.mubr.f32.gmra.mrb[0].mxu0 %v312
      %v476 = vpop.f32.mrb[0].mxu0
      %v477 = vadd.f32 0.0, %v476
      %v478 = vpop.f32.mrb[0].mxu0
      %479 = vmatprep.mubr.f32.mxu0 0.0
      %480 = vmatmul.mubr.f32.gmra.mrb[0].mxu0 %v315
      %v481 = vpop.f32.mrb[0].mxu0
      %v482 = vadd.f32 0.0, %v481
      %v483 = vpop.f32.mrb[0].mxu0
      %484 = vdwg.mxu0
      %vm485 = vcmask 130048
      %v487 = vsel %vm485, %v298, 0
      %v490 = vsel %vm485, %v299, 0
      %492 = vmatprep.subr.mxu0 0.0
      %493 = vmatpush1.msra.mxu0 %v384
      %494 = vmatprep.subr.mxu0 0.0
      %495 = vmatpush1.msra.mxu0 %v389
      %496 = vmatprep.subr.mxu0 0.0
      %497 = vmatpush1.msra.mxu0 0.0
      %498 = vmatprep.subr.mxu0 0.0
      %499 = vmatpush1.msra.mxu0 0.0
      %500 = vmatprep.subr.mxu0 0.0
      %501 = vmatpush1.msra.mxu0 0.0
      %502 = vmatprep.subr.mxu0 0.0
      %503 = vmatpush1.msra.mxu0 0.0
      %504 = vmatprep.subr.mxu0 0.0
      %505 = vmatpush1.msra.mxu0 0.0
      %506 = vmatprep.subr.mxu0 0.0
      %507 = vmatpush1.msra.mxu0 0.0
      %508 = vmatprep.subr.mxu0 0.0
      %509 = vmatpush1.msra.mxu0 0.0
      %510 = vmatprep.subr.mxu0 0.0
      %511 = vmatpush1.msra.mxu0 0.0
      %512 = vmatprep.subr.mxu0 0.0
      %513 = vmatpush1.msra.mxu0 0.0
      %514 = vmatprep.subr.mxu0 0.0
      %515 = vmatpush1.msra.mxu0 0.0
      %516 = vmatprep.subr.mxu0 0.0
      %517 = vmatpush1.msra.mxu0 0.0
      %518 = vmatprep.subr.mxu0 0.0
      %519 = vmatpush1.msra.mxu0 0.0
      %520 = vmatprep.subr.mxu0 0.0
      %521 = vmatpush1.msra.mxu0 0.0
      %522 = vmatprep.subr.mxu0 0.0
      %523 = vmatpush1.msra.mxu0 0.0
      %524 = vmatprep.subr.mxu0 0.0
      %525 = vmatpush1.msra.mxu0 0.0
      %526 = vmatprep.subr.mxu0 0.0
      %527 = vmatpush1.msra.mxu0 0.0
      %528 = vmatprep.subr.mxu0 0.0
      %529 = vmatpush1.msra.mxu0 0.0
      %530 = vmatprep.subr.mxu0 0.0
      %531 = vmatpush1.msra.mxu0 0.0
      %532 = vmatprep.subr.mxu0 0.0
      %533 = vmatpush1.msra.mxu0 0.0
      %534 = vmatprep.subr.mxu0 0.0
      %535 = vmatpush1.msra.mxu0 0.0
      %536 = vmatprep.subr.mxu0 0.0
      %537 = vmatpush1.msra.mxu0 0.0
      %538 = vmatprep.subr.mxu0 0.0
      %539 = vmatpush1.msra.mxu0 0.0
      %540 = vmatprep.subr.mxu0 0.0
      %541 = vmatpush1.msra.mxu0 0.0
      %542 = vmatprep.subr.mxu0 0.0
      %543 = vmatpush1.msra.mxu0 0.0
      %544 = vmatprep.subr.mxu0 0.0
      %545 = vmatpush1.msra.mxu0 0.0
      %546 = vmatprep.subr.mxu0 0.0
      %547 = vmatpush1.msra.mxu0 0.0
      %548 = vmatprep.subr.mxu0 0.0
      %549 = vmatpush1.msra.mxu0 0.0
      %550 = vmatprep.subr.mxu0 0.0
      %551 = vmatpush1.msra.mxu0 0.0
      %552 = vmatprep.subr.mxu0 0.0
      %553 = vmatpush1.msra.mxu0 0.0
      %554 = vmatprep.subr.mxu0 0.0
      %555 = vmatpush1.msra.mxu0 0.0
      %556 = vmatprep.mubr.f32.mxu0 0.0
      %557 = vmatmul.mubr.f32.gmra.mrb[0].mxu0 %v487
      %v558 = vpop.f32.mrb[0].mxu0
      %v559 = vadd.f32 0.0, %v558
      %v560 = vpop.f32.mrb[0].mxu0
      %561 = vmatprep.mubr.f32.mxu0 0.0
      %562 = vmatmul.mubr.f32.gmra.mrb[0].mxu0 %v490
      %v563 = vpop.f32.mrb[0].mxu0
      %v564 = vadd.f32 0.0, %v563
      %v565 = vpop.f32.mrb[0].mxu0
      %566 = vdwg.mxu0
      %567 = vmatprep.subr.mxu0 0.0
      %568 = vmatpush1.msra.mxu0 %v393
      %569 = vmatprep.subr.mxu0 0.0
      %570 = vmatpush1.msra.mxu0 %v394
      %571 = vmatprep.subr.mxu0 0.0
      %572 = vmatpush1.msra.mxu0 %v395
      %573 = vmatprep.subr.mxu0 0.0
      %574 = vmatpush1.msra.mxu0 %v396
      %575 = vmatprep.subr.mxu0 0.0
      %576 = vmatpush1.msra.mxu0 %v397
      %577 = vmatprep.subr.mxu0 0.0
      %578 = vmatpush1.msra.mxu0 %v398
      %579 = vmatprep.subr.mxu0 0.0
      %580 = vmatpush1.msra.mxu0 %v399
      %581 = vmatprep.subr.mxu0 0.0
      %582 = vmatpush1.msra.mxu0 %v400
      %583 = vmatprep.subr.mxu0 0.0
      %584 = vmatpush1.msra.mxu0 0.0
      %585 = vmatprep.subr.mxu0 0.0
      %586 = vmatpush1.msra.mxu0 0.0
      %587 = vmatprep.subr.mxu0 0.0
      %588 = vmatpush1.msra.mxu0 0.0
      %589 = vmatprep.subr.mxu0 0.0
      %590 = vmatpush1.msra.mxu0 0.0
      %591 = vmatprep.subr.mxu0 0.0
      %592 = vmatpush1.msra.mxu0 0.0
      %593 = vmatprep.subr.mxu0 0.0
      %594 = vmatpush1.msra.mxu0 0.0
      %595 = vmatprep.subr.mxu0 0.0
      %596 = vmatpush1.msra.mxu0 0.0
      %597 = vmatprep.subr.mxu0 0.0
      %598 = vmatpush1.msra.mxu0 0.0
      %599 = vmatprep.subr.mxu0 0.0
      %600 = vmatpush1.msra.mxu0 0.0
      %601 = vmatprep.subr.mxu0 0.0
      %602 = vmatpush1.msra.mxu0 0.0
      %603 = vmatprep.subr.mxu0 0.0
      %604 = vmatpush1.msra.mxu0 0.0
      %605 = vmatprep.subr.mxu0 0.0
      %606 = vmatpush1.msra.mxu0 0.0
      %607 = vmatprep.subr.mxu0 0.0
      %608 = vmatpush1.msra.mxu0 0.0
      %609 = vmatprep.subr.mxu0 0.0
      %610 = vmatpush1.msra.mxu0 0.0
      %611 = vmatprep.subr.mxu0 0.0
      %612 = vmatpush1.msra.mxu0 0.0
      %613 = vmatprep.subr.mxu0 0.0
      %614 = vmatpush1.msra.mxu0 0.0
      %615 = vmatprep.subr.mxu0 0.0
      %616 = vmatpush1.msra.mxu0 0.0
      %617 = vmatprep.subr.mxu0 0.0
      %618 = vmatpush1.msra.mxu0 0.0
      %619 = vmatprep.subr.mxu0 0.0
      %620 = vmatpush1.msra.mxu0 0.0
      %621 = vmatprep.subr.mxu0 0.0
      %622 = vmatpush1.msra.mxu0 0.0
      %623 = vmatprep.subr.mxu0 0.0
      %624 = vmatpush1.msra.mxu0 0.0
      %625 = vmatprep.subr.mxu0 0.0
      %626 = vmatpush1.msra.mxu0 0.0
      %627 = vmatprep.subr.mxu0 0.0
      %628 = vmatpush1.msra.mxu0 0.0
      %629 = vmatprep.subr.mxu0 0.0
      %630 = vmatpush1.msra.mxu0 0.0
      %631 = vmatprep.mubr.f32.mxu0 0.0
      %632 = vmatmul.mubr.f32.gmra.mrb[0].mxu0 %v312
      %v633 = vpop.f32.mrb[0].mxu0
      %v634 = vadd.f32 %v559, %v633
      %v635 = vpop.f32.mrb[0].mxu0
      %636 = vmatprep.mubr.f32.mxu0 0.0
      %637 = vmatmul.mubr.f32.gmra.mrb[0].mxu0 %v315
      %v638 = vpop.f32.mrb[0].mxu0
      %v639 = vadd.f32 %v564, %v638
      %v640 = vpop.f32.mrb[0].mxu0
      %641 = vdwg.mxu0
      %v643 = vsel %vm485, %v300, 0
      %v646 = vsel %vm485, %v301, 0
      %648 = vmatprep.subr.mxu0 0.0
      %649 = vmatpush1.msra.mxu0 %v477
      %650 = vmatprep.subr.mxu0 0.0
      %651 = vmatpush1.msra.mxu0 %v482
      %652 = vmatprep.subr.mxu0 0.0
      %653 = vmatpush1.msra.mxu0 0.0
      %654 = vmatprep.subr.mxu0 0.0
      %655 = vmatpush1.msra.mxu0 0.0
      %656 = vmatprep.subr.mxu0 0.0
      %657 = vmatpush1.msra.mxu0 0.0
      %658 = vmatprep.subr.mxu0 0.0
      %659 = vmatpush1.msra.mxu0 0.0
      %660 = vmatprep.subr.mxu0 0.0
      %661 = vmatpush1.msra.mxu0 0.0
      %662 = vmatprep.subr.mxu0 0.0
      %663 = vmatpush1.msra.mxu0 0.0
      %664 = vmatprep.subr.mxu0 0.0
      %665 = vmatpush1.msra.mxu0 0.0
      %666 = vmatprep.subr.mxu0 0.0
      %667 = vmatpush1.msra.mxu0 0.0
      %668 = vmatprep.subr.mxu0 0.0
      %669 = vmatpush1.msra.mxu0 0.0
      %670 = vmatprep.subr.mxu0 0.0
      %671 = vmatpush1.msra.mxu0 0.0
      %672 = vmatprep.subr.mxu0 0.0
      %673 = vmatpush1.msra.mxu0 0.0
      %674 = vmatprep.subr.mxu0 0.0
      %675 = vmatpush1.msra.mxu0 0.0
      %676 = vmatprep.subr.mxu0 0.0
      %677 = vmatpush1.msra.mxu0 0.0
      %678 = vmatprep.subr.mxu0 0.0
      %679 = vmatpush1.msra.mxu0 0.0
      %680 = vmatprep.subr.mxu0 0.0
      %681 = vmatpush1.msra.mxu0 0.0
      %682 = vmatprep.subr.mxu0 0.0
      %683 = vmatpush1.msra.mxu0 0.0
      %684 = vmatprep.subr.mxu0 0.0
      %685 = vmatpush1.msra.mxu0 0.0
      %686 = vmatprep.subr.mxu0 0.0
      %687 = vmatpush1.msra.mxu0 0.0
      %688 = vmatprep.subr.mxu0 0.0
      %689 = vmatpush1.msra.mxu0 0.0
      %690 = vmatprep.subr.mxu0 0.0
      %691 = vmatpush1.msra.mxu0 0.0
      %692 = vmatprep.subr.mxu0 0.0
      %693 = vmatpush1.msra.mxu0 0.0
      %694 = vmatprep.subr.mxu0 0.0
      %695 = vmatpush1.msra.mxu0 0.0
      %696 = vmatprep.subr.mxu0 0.0
      %697 = vmatpush1.msra.mxu0 0.0
      %698 = vmatprep.subr.mxu0 0.0
      %699 = vmatpush1.msra.mxu0 0.0
      %700 = vmatprep.subr.mxu0 0.0
      %701 = vmatpush1.msra.mxu0 0.0
      %702 = vmatprep.subr.mxu0 0.0
      %703 = vmatpush1.msra.mxu0 0.0
      %704 = vmatprep.subr.mxu0 0.0
      %705 = vmatpush1.msra.mxu0 0.0
      %706 = vmatprep.subr.mxu0 0.0
      %707 = vmatpush1.msra.mxu0 0.0
      %708 = vmatprep.subr.mxu0 0.0
      %709 = vmatpush1.msra.mxu0 0.0
      %710 = vmatprep.subr.mxu0 0.0
      %711 = vmatpush1.msra.mxu0 0.0
      %712 = vmatprep.mubr.f32.mxu0 0.0
      %713 = vmatmul.mubr.f32.gmra.mrb[0].mxu0 %v643
      %v714 = vpop.f32.mrb[0].mxu0
      %v715 = vadd.f32 0.0, %v714
      %v716 = vpop.f32.mrb[0].mxu0
      %717 = vmatprep.mubr.f32.mxu0 0.0
      %718 = vmatmul.mubr.f32.gmra.mrb[0].mxu0 %v646
      %v719 = vpop.f32.mrb[0].mxu0
      %v720 = vadd.f32 0.0, %v719
      %v721 = vpop.f32.mrb[0].mxu0
      %722 = vdwg.mxu0
      %v723 = vadd.f32 %v634, %v715
      %v724 = vadd.f32 %v639, %v720
      %v725 = vld [vmem:[%s2] sm:$0x1]
      %v727 = vlaneseq
      %v728 = vshrl.u32 %v727, 7
      %v729 = vsub.s32 0, %v728
      %v730 = vrot.slane %v725, %v729
      %v732 = vadd.f32 %v723, %v730
      %v733 = vadd.f32 %v724, %v730
      %734 = vst [vmem:[%s289] sm:$0xff] %v732
      %735 = vst [vmem:[%s289 + $0x8] sm:$0xff] %v733
      %v736 = vadd.f32 %v732, %v733
      %v737 = vrot.slane %v736, 4
      %v738 = vadd.f32 %v736, %v737
      %v739 = vrot.slane %v738, 2
      %v740 = vadd.f32 %v738, %v739
      %v741 = vrot.slane %v740, 1
      %v742 = vadd.f32 %v740, %v741
      %743 = vst [vmem:[%s292] sm:$0x1] %v742
      %v744 = vmul.f32 %v732, %v732
      %v745 = vmul.f32 %v733, %v733
      %v746 = vadd.f32 %v744, %v745
      %v747 = vrot.slane %v746, 4
      %v748 = vadd.f32 %v746, %v747
      %v749 = vrot.slane %v748, 2
      %v750 = vadd.f32 %v748, %v749
      %v751 = vrot.slane %v750, 1
      %v752 = vadd.f32 %v750, %v751
      %753 = vst [vmem:[%s295] sm:$0x1] %v752
      %p754 = scmp.lt.s32.totalorder %s19, 1
      %s755 = scalar_select %p754, %s19, 1
      %s756 = smul.addr %s755, 2
      %s757 = smul.addr %s756, 8
      %s758 = scalar_lea.vmem %s5, %s757
      %p759 = scmp.lt.s32.totalorder %s19, 1
      %s760 = scalar_select %p759, %s19, 1
      %s761 = scalar_lea.vmem %s6, %s760
      %p762 = scmp.lt.s32.totalorder %s19, 1
      %s763 = scalar_select %p762, %s19, 1
      %s764 = scalar_lea.vmem %s7, %s763
      // Predicated region
      $region41: #{conv_ycf_forward.2} parent=39 // pred_check
        %p765 = pneg %p147
      $region42: #{conv_ycf_forward.2} parent=39 // pred_check_branch
        %767 = sbr.rel (%p765) target = $region44
      $region43: #{conv_ycf_forward.2} parent=39 // pred_region
        _
      $region44: #{conv_ycf_forward.2} parent=39 // pred_fallthru
        _
      // Predicated region
      $region45: #{conv_ycf_forward.2} parent=39 // pred_check
        %p768 = pneg %p173
      $region46: #{conv_ycf_forward.2} parent=39 // pred_check_branch
        %770 = sbr.rel (%p768) target = $region48
      $region47: #{conv_ycf_forward.2} parent=39 // pred_region
        _
      $region48: #{conv_ycf_forward.2} parent=39 // pred_fallthru
        _
      // Predicated region
      $region49: #{conv_ycf_forward.2} parent=39 // pred_check
        %p771 = pneg %p199
      $region50: #{conv_ycf_forward.2} parent=39 // pred_check_branch
        %773 = sbr.rel (%p771) target = $region52
      $region51: #{conv_ycf_forward.2} parent=39 // pred_region
        _
      $region52: #{conv_ycf_forward.2} parent=39 // pred_fallthru
        _
    $region40: #{conv_ycf_forward.2} parent=5 // pred_fallthru
      _
    %p774 = scmp.le.s32.totalorder 2, %s14
    // Predicated region
    $region53: #{conv_ycf_forward.2} parent=5 // pred_check
      %p775 = pneg %p774
    $region54: #{conv_ycf_forward.2} parent=5 // pred_check_branch
      %777 = sbr.rel (%p775) target = $region56
    $region55: #{conv_ycf_forward.2} parent=5 // pred_region
      %s778 = ssub.s32 %s14, 2
      // Predicated region
      $region57: #{conv_ycf_forward.2} parent=55 // pred_check
        %p779 = pneg %p153
      $region58: #{conv_ycf_forward.2} parent=55 // pred_check_branch
        %781 = sbr.rel (%p779) target = $region60
      $region59: #{conv_ycf_forward.2} parent=55 // pred_region
        %p782 = scmp.lt.s32.totalorder %s20, 1
        %s783 = scalar_select %p782, %s20, 1
        %s784 = smul.addr %s783, 2
        %s785 = smul.addr %s784, 8
        %s786 = scalar_lea.vmem %s5, %s785
      $region60: #{conv_ycf_forward.2} parent=55 // pred_fallthru
        _
      // Predicated region
      $region61: #{conv_ycf_forward.2} parent=55 // pred_check
        %p787 = pneg %p179
      $region62: #{conv_ycf_forward.2} parent=55 // pred_check_branch
        %789 = sbr.rel (%p787) target = $region64
      $region63: #{conv_ycf_forward.2} parent=55 // pred_region
        %p790 = scmp.lt.s32.totalorder %s20, 1
        %s791 = scalar_select %p790, %s20, 1
        %s792 = scalar_lea.vmem %s6, %s791
      $region64: #{conv_ycf_forward.2} parent=55 // pred_fallthru
        _
      // Predicated region
      $region65: #{conv_ycf_forward.2} parent=55 // pred_check
        %p793 = pneg %p205
      $region66: #{conv_ycf_forward.2} parent=55 // pred_check_branch
        %795 = sbr.rel (%p793) target = $region68
      $region67: #{conv_ycf_forward.2} parent=55 // pred_region
        %p796 = scmp.lt.s32.totalorder %s20, 1
        %s797 = scalar_select %p796, %s20, 1
        %s798 = scalar_lea.vmem %s7, %s797
      $region68: #{conv_ycf_forward.2} parent=55 // pred_fallthru
        _
    $region56: #{conv_ycf_forward.2} parent=5 // pred_fallthru
      _
  $region6: #{conv_ycf_forward.2} parent=0 // loop_footer
    %s18 = sadd.s32 1, %s14
  $region7: #{conv_ycf_forward.2} parent=0 // loop_footer_branch
    %13 = sbr.rel target = $region3
  $region8: #{conv_ycf_forward.2} parent=0 // loop_exit
    _

// kernel: conv_ycf_forward.3
$region0: #{conv_ycf_forward.3}
  #allocation0 [shape = 'u32[]', space=smem, size = 0x4, offset = 0x4, fixed_abs, tag = 'smem constant byte address 0x4 - core index']
  #allocation1 [shape = 'u32[144,128]{1,0:T(1,128)}', space=vmem, size = 0x12000, scoped, tag = 'internal scratch']
  %s0 = inlined_call_operand.vmem [shape: f32[2,16,128], index: 0, kind: input, shape index: {}]
  %s1 = inlined_call_operand.vmem [shape: f32[1,128], index: 1, kind: input, shape index: {}]
  %s2 = inlined_call_operand.vmem [shape: f32[1,128], index: 2, kind: input, shape index: {}]
  %s3 = inlined_call_operand.vmem [shape: f32[3,128,128], index: 3, kind: input, shape index: {}]
  %s4 = inlined_call_operand.vmem [shape: f32[1,128], index: 4, kind: input, shape index: {}]
  %s5 = inlined_call_operand.vmem [shape: f32[16,16], index: 5, kind: input, shape index: {}]
  %s6 = inlined_call_operand.vmem [shape: f32[16,16], index: 6, kind: input, shape index: {}]
  %s7 = inlined_call_operand.vmem [shape: f32[2,16,128], index: 7, kind: output, shape index: {}]
  %s8 = sld [smem:[#allocation0]]
  $region61: #{conv_ycf_forward.3} parent=0
    _
  %s10 = ssub.s32 1, %s8
  %s11 = scalar_select 0, %s10, %s8
  loop: start=0, step=1, limit=4
  $region2: #{conv_ycf_forward.3} parent=0 // loop_pre_header
    _
  $region3: #{conv_ycf_forward.3} parent=0 // loop_header
    %s13 = sphi 0, %s17
    %p14 = scmp.ge.s32.totalorder %s13, 4
    %s23 = sphi 0, %s25
    %s26 = sphi 0, %s23
    %s27 = sphi 0, %s26
    %s43 = sphi 0, %s27
    %s47 = sphi 0, %s47
    %s49 = sphi 0, %s47
    %s50 = sphi 0, %s49
    %s64 = sphi 0, %s50
    %s68 = sphi 0, %s68
    %s70 = sphi 0, %s68
    %s71 = sphi 0, %s70
    %s85 = sphi 0, %s71
    %s89 = sphi 0, %s89
    %s91 = sphi 0, %s89
    %s92 = sphi 0, %s91
    %s106 = sphi 0, %s92
    %s110 = sphi 0, %s110
    %s112 = sphi 0, %s110
    %s113 = sphi 0, %s112
    %s127 = sphi 0, %s113
    %s131 = sphi 0, %s131
    %s133 = sphi 0, %s131
    %s134 = sphi 0, %s133
    %s148 = sphi 0, %s134
    %s152 = sphi 0, %s152
    %s154 = sphi 0, %s152
    %s155 = sphi 0, %s154
    %s169 = sphi 0, %s155
    %s175 = sphi 0, %s177
    %s178 = sphi 0, %s175
    %s179 = sphi 0, %s178
    %s195 = sphi 0, %s179
  $region4: #{conv_ycf_forward.3} parent=0 // loop_header_branch
    %16 = sbr.rel (%p14) target = $region8
  $region5: #{conv_ycf_forward.3} parent=0 // loop_body
    %s18 = ssub.s32 %s13, 1
    %s19 = ssub.s32 %s13, 2
    %s20 = sadd.s32 %s13, 1
    %s21 = ssub.s32 %s13, %s20
    %p22 = scmp.eq.s32.totalorder %s21, 0
    %s24 = sadd.s32 %s23, 1
    %s25 = scalar_select %p22, %s23, %s24
    %p28 = pneg %p22
    %p29 = scmp.eq.s32.totalorder %s13, 1
    %p30 = por %p28, %p29
    %p31 = scmp.ne.s32.totalorder %s23, %s26
    %p32 = scmp.eq.s32.totalorder %s13, 0
    %p33 = por %p31, %p32
    %p34 = scmp.ne.s32.totalorder %s23, %s26
    %p35 = scmp.eq.s32.totalorder %s18, 1
    %p36 = por %p34, %p35
    %p37 = scmp.ne.s32.totalorder %s26, %s27
    %p38 = scmp.eq.s32.totalorder %s18, 0
    %p39 = por %p37, %p38
    %p40 = scmp.ne.s32.totalorder %s26, %s27
    %p41 = scmp.eq.s32.totalorder %s19, 1
    %p42 = por %p40, %p41
    %p44 = scmp.ne.s32.totalorder %s27, %s43
    %p45 = scmp.eq.s32.totalorder %s19, 0
    %p46 = por %p44, %p45
    %s48 = sadd.s32 %s47, 1
    %p51 = scmp.eq.s32.totalorder %s13, 1
    %p52 = scmp.ne.s32.totalorder %s47, %s49
    %p53 = scmp.eq.s32.totalorder %s13, 0
    %p54 = por %p52, %p53
    %p55 = scmp.ne.s32.totalorder %s47, %s49
    %p56 = scmp.eq.s32.totalorder %s18, 1
    %p57 = por %p55, %p56
    %p58 = scmp.ne.s32.totalorder %s49, %s50
    %p59 = scmp.eq.s32.totalorder %s18, 0
    %p60 = por %p58, %p59
    %p61 = scmp.ne.s32.totalorder %s49, %s50
    %p62 = scmp.eq.s32.totalorder %s19, 1
    %p63 = por %p61, %p62
    %p65 = scmp.ne.s32.totalorder %s50, %s64
    %p66 = scmp.eq.s32.totalorder %s19, 0
    %p67 = por %p65, %p66
    %s69 = sadd.s32 %s68, 1
    %p72 = scmp.eq.s32.totalorder %s13, 1
    %p73 = scmp.ne.s32.totalorder %s68, %s70
    %p74 = scmp.eq.s32.totalorder %s13, 0
    %p75 = por %p73, %p74
    %p76 = scmp.ne.s32.totalorder %s68, %s70
    %p77 = scmp.eq.s32.totalorder %s18, 1
    %p78 = por %p76, %p77
    %p79 = scmp.ne.s32.totalorder %s70, %s71
    %p80 = scmp.eq.s32.totalorder %s18, 0
    %p81 = por %p79, %p80
    %p82 = scmp.ne.s32.totalorder %s70, %s71
    %p83 = scmp.eq.s32.totalorder %s19, 1
    %p84 = por %p82, %p83
    %p86 = scmp.ne.s32.totalorder %s71, %s85
    %p87 = scmp.eq.s32.totalorder %s19, 0
    %p88 = por %p86, %p87
    %s90 = sadd.s32 %s89, 1
    %p93 = scmp.eq.s32.totalorder %s13, 1
    %p94 = scmp.ne.s32.totalorder %s89, %s91
    %p95 = scmp.eq.s32.totalorder %s13, 0
    %p96 = por %p94, %p95
    %p97 = scmp.ne.s32.totalorder %s89, %s91
    %p98 = scmp.eq.s32.totalorder %s18, 1
    %p99 = por %p97, %p98
    %p100 = scmp.ne.s32.totalorder %s91, %s92
    %p101 = scmp.eq.s32.totalorder %s18, 0
    %p102 = por %p100, %p101
    %p103 = scmp.ne.s32.totalorder %s91, %s92
    %p104 = scmp.eq.s32.totalorder %s19, 1
    %p105 = por %p103, %p104
    %p107 = scmp.ne.s32.totalorder %s92, %s106
    %p108 = scmp.eq.s32.totalorder %s19, 0
    %p109 = por %p107, %p108
    %s111 = sadd.s32 %s110, 1
    %p114 = scmp.eq.s32.totalorder %s13, 1
    %p115 = scmp.ne.s32.totalorder %s110, %s112
    %p116 = scmp.eq.s32.totalorder %s13, 0
    %p117 = por %p115, %p116
    %p118 = scmp.ne.s32.totalorder %s110, %s112
    %p119 = scmp.eq.s32.totalorder %s18, 1
    %p120 = por %p118, %p119
    %p121 = scmp.ne.s32.totalorder %s112, %s113
    %p122 = scmp.eq.s32.totalorder %s18, 0
    %p123 = por %p121, %p122
    %p124 = scmp.ne.s32.totalorder %s112, %s113
    %p125 = scmp.eq.s32.totalorder %s19, 1
    %p126 = por %p124, %p125
    %p128 = scmp.ne.s32.totalorder %s113, %s127
    %p129 = scmp.eq.s32.totalorder %s19, 0
    %p130 = por %p128, %p129
    %s132 = sadd.s32 %s131, 1
    %p135 = scmp.eq.s32.totalorder %s13, 1
    %p136 = scmp.ne.s32.totalorder %s131, %s133
    %p137 = scmp.eq.s32.totalorder %s13, 0
    %p138 = por %p136, %p137
    %p139 = scmp.ne.s32.totalorder %s131, %s133
    %p140 = scmp.eq.s32.totalorder %s18, 1
    %p141 = por %p139, %p140
    %p142 = scmp.ne.s32.totalorder %s133, %s134
    %p143 = scmp.eq.s32.totalorder %s18, 0
    %p144 = por %p142, %p143
    %p145 = scmp.ne.s32.totalorder %s133, %s134
    %p146 = scmp.eq.s32.totalorder %s19, 1
    %p147 = por %p145, %p146
    %p149 = scmp.ne.s32.totalorder %s134, %s148
    %p150 = scmp.eq.s32.totalorder %s19, 0
    %p151 = por %p149, %p150
    %s153 = sadd.s32 %s152, 1
    %p156 = scmp.eq.s32.totalorder %s13, 1
    %p157 = scmp.ne.s32.totalorder %s152, %s154
    %p158 = scmp.eq.s32.totalorder %s13, 0
    %p159 = por %p157, %p158
    %p160 = scmp.ne.s32.totalorder %s152, %s154
    %p161 = scmp.eq.s32.totalorder %s18, 1
    %p162 = por %p160, %p161
    %p163 = scmp.ne.s32.totalorder %s154, %s155
    %p164 = scmp.eq.s32.totalorder %s18, 0
    %p165 = por %p163, %p164
    %p166 = scmp.ne.s32.totalorder %s154, %s155
    %p167 = scmp.eq.s32.totalorder %s19, 1
    %p168 = por %p166, %p167
    %p170 = scmp.ne.s32.totalorder %s155, %s169
    %p171 = scmp.eq.s32.totalorder %s19, 0
    %p172 = por %p170, %p171
    %s173 = ssub.s32 %s13, %s20
    %p174 = scmp.eq.s32.totalorder %s173, 0
    %s176 = sadd.s32 %s175, 1
    %s177 = scalar_select %p174, %s175, %s176
    %p180 = pneg %p174
    %p181 = scmp.eq.s32.totalorder %s13, 1
    %p182 = por %p180, %p181
    %p183 = scmp.ne.s32.totalorder %s175, %s178
    %p184 = scmp.eq.s32.totalorder %s13, 0
    %p185 = por %p183, %p184
    %p186 = scmp.ne.s32.totalorder %s175, %s178
    %p187 = scmp.eq.s32.totalorder %s18, 1
    %p188 = por %p186, %p187
    %p189 = scmp.ne.s32.totalorder %s178, %s179
    %p190 = scmp.eq.s32.totalorder %s18, 0
    %p191 = por %p189, %p190
    %p192 = scmp.ne.s32.totalorder %s178, %s179
    %p193 = scmp.eq.s32.totalorder %s19, 1
    %p194 = por %p192, %p193
    %p196 = scmp.ne.s32.totalorder %s179, %s195
    %p197 = scmp.eq.s32.totalorder %s19, 0
    %p198 = por %p196, %p197
    %p199 = scmp.le.s32.totalorder 1, %s13
    %p200 = scmp.lt.s32.totalorder %s13, 3
    %p201 = pnand %p199, %p200
    %p202 = pneg %p201
    // Predicated region
    $region9: #{conv_ycf_forward.3} parent=5 // pred_check
      _
    $region10: #{conv_ycf_forward.3} parent=5 // pred_check_branch
      %204 = sbr.rel (%p201) target = $region12
    $region11: #{conv_ycf_forward.3} parent=5 // pred_region
      %s205 = ssub.s32 %s13, 1
      // Predicated region
      $region13: #{conv_ycf_forward.3} parent=11 // pred_check
        %p206 = pneg %p60
      $region14: #{conv_ycf_forward.3} parent=11 // pred_check_branch
        %208 = sbr.rel (%p206) target = $region16
      $region15: #{conv_ycf_forward.3} parent=11 // pred_region
        _
      $region16: #{conv_ycf_forward.3} parent=11 // pred_fallthru
        _
      // Predicated region
      $region17: #{conv_ycf_forward.3} parent=11 // pred_check
        %p209 = pneg %p81
      $region18: #{conv_ycf_forward.3} parent=11 // pred_check_branch
        %211 = sbr.rel (%p209) target = $region20
      $region19: #{conv_ycf_forward.3} parent=11 // pred_region
        _
      $region20: #{conv_ycf_forward.3} parent=11 // pred_fallthru
        _
      // Predicated region
      $region21: #{conv_ycf_forward.3} parent=11 // pred_check
        %p212 = pneg %p102
      $region22: #{conv_ycf_forward.3} parent=11 // pred_check_branch
        %214 = sbr.rel (%p212) target = $region24
      $region23: #{conv_ycf_forward.3} parent=11 // pred_region
        _
      $region24: #{conv_ycf_forward.3} parent=11 // pred_fallthru
        _
      // Predicated region
      $region25: #{conv_ycf_forward.3} parent=11 // pred_check
        %p215 = pneg %p123
      $region26: #{conv_ycf_forward.3} parent=11 // pred_check_branch
        %217 = sbr.rel (%p215) target = $region28
      $region27: #{conv_ycf_forward.3} parent=11 // pred_region
        _
      $region28: #{conv_ycf_forward.3} parent=11 // pred_fallthru
        _
      // Predicated region
      $region29: #{conv_ycf_forward.3} parent=11 // pred_check
        %p218 = pneg %p144
      $region30: #{conv_ycf_forward.3} parent=11 // pred_check_branch
        %220 = sbr.rel (%p218) target = $region32
      $region31: #{conv_ycf_forward.3} parent=11 // pred_region
        _
      $region32: #{conv_ycf_forward.3} parent=11 // pred_fallthru
        _
      // Predicated region
      $region33: #{conv_ycf_forward.3} parent=11 // pred_check
        %p221 = pneg %p165
      $region34: #{conv_ycf_forward.3} parent=11 // pred_check_branch
        %223 = sbr.rel (%p221) target = $region36
      $region35: #{conv_ycf_forward.3} parent=11 // pred_region
        _
      $region36: #{conv_ycf_forward.3} parent=11 // pred_fallthru
        _
    $region12: #{conv_ycf_forward.3} parent=5 // pred_fallthru
      _
    %p224 = scmp.lt.s32.totalorder %s13, 2
    // Predicated region
    $region37: #{conv_ycf_forward.3} parent=5 // pred_check
      %p225 = pneg %p224
    $region38: #{conv_ycf_forward.3} parent=5 // pred_check_branch
      %227 = sbr.rel (%p225) target = $region40
    $region39: #{conv_ycf_forward.3} parent=5 // pred_region
      // Predicated region
      $region41: #{conv_ycf_forward.3} parent=39 // pred_check
        %p228 = pneg %p33
      $region42: #{conv_ycf_forward.3} parent=39 // pred_check_branch
        %230 = sbr.rel (%p228) target = $region44
      $region43: #{conv_ycf_forward.3} parent=39 // pred_region
        %p231 = scmp.lt.s32.totalorder %s13, 1
        %s232 = scalar_select %p231, %s13, 1
        %s233 = smul.addr %s232, 2
        %s234 = smul.addr %s233, 8
        %s235 = scalar_lea.vmem %s0, %s234
      $region44: #{conv_ycf_forward.3} parent=39 // pred_fallthru
        _
    $region40: #{conv_ycf_forward.3} parent=5 // pred_fallthru
      _
    %p236 = scmp.le.s32.totalorder 1, %s13
    %p237 = scmp.lt.s32.totalorder %s13, 3
    %p238 = pnand %p236, %p237
    %p239 = pneg %p238
    // Predicated region
    $region45: #{conv_ycf_forward.3} parent=5 // pred_check
      _
    $region46: #{conv_ycf_forward.3} parent=5 // pred_check_branch
      %241 = sbr.rel (%p238) target = $region48
    $region47: #{conv_ycf_forward.3} parent=5 // pred_region
      %s242 = ssub.s32 %s13, 1
      %p243 = scmp.lt.s32.totalorder %s18, 1
      %s244 = scalar_select %p243, %s18, 1
      %s245 = smul.addr %s244, 2
      %s246 = smul.addr %s245, 8
      %s247 = scalar_lea.vmem %s0, %s246
      %p248 = pneg %p39
      %p249 = pneg %p36
      %p250 = pneg %p60
      %p251 = pneg %p57
      %p252 = pneg %p81
      %p253 = pneg %p78
      %p254 = pneg %p102
      %p255 = pneg %p99
      %p256 = pneg %p123
      %p257 = pneg %p120
      %p258 = pneg %p144
      %p259 = pneg %p141
      %p260 = pneg %p165
      %p261 = pneg %p162
      %p262 = pneg %p191
      %p263 = pneg %p188
      %p264 = scmp.lt.s32.totalorder %s18, 1
      %s265 = scalar_select %p264, %s18, 1
      %s266 = smul.addr %s265, 2
      %s267 = smul.addr %s266, 8
      %s268 = scalar_lea.vmem %s7, %s267
      %p269 = scmp.lt.s32.totalorder %s18, 1
      %s270 = scalar_select %p269, %s18, 1
      %s271 = smul.addr %s270, 2
      %s272 = smul.addr %s271, 8
      %s273 = scalar_lea.vmem %s0, %s272
      %p274 = scmp.lt.s32.totalorder %s18, 1
      %s275 = scalar_select %p274, %s18, 1
      %s276 = smul.addr %s275, 2
      %s277 = smul.addr %s276, 8
      %s278 = scalar_lea.vmem %s7, %s277
      %v279 = vld [vmem:[%s273] sm:$0xff]
      %v280 = vld [vmem:[%s273 + $0x8] sm:$0xff]
      %v281 = vld [vmem:[%s1] sm:$0x1]
      %v283 = vlaneseq
      %v284 = vshrl.u32 %v283, 7
      %v285 = vsub.s32 0, %v284
      %v286 = vrot.slane %v281, %v285
      %v288 = vmul.f32 %v279, %v286
      %v289 = vmul.f32 %v280, %v286
      %v290 = vld [vmem:[%s2] sm:$0x1]
      %v292 = vlaneseq
      %v293 = vshrl.u32 %v292, 7
      %v294 = vsub.s32 0, %v293
      %v295 = vrot.slane %v290, %v294
      %v297 = vadd.f32 %v288, %v295
      %v298 = vadd.f32 %v289, %v295
      %v299 = vmax.f32 %v297, 0.0
      %v300 = vmax.f32 %v298, 0.0
      %v301 = vld [vmem:[%s5] sm:$0xff]
      %v302 = vld [vmem:[%s5 + $0x8] sm:$0xff]
      %v303 = vld [vmem:[%s6] sm:$0xff]
      %v304 = vld [vmem:[%s6 + $0x8] sm:$0xff]
      %v305 = vld [vmem:[%s3] sm:$0xff]
      %v306 = vld [vmem:[%s3 + $0x8] sm:$0xff]
      %v307 = vld [vmem:[%s3 + $0x10] sm:$0xff]
      %v308 = vld [vmem:[%s3 + $0x18] sm:$0xff]
      %v309 = vld [vmem:[%s3 + $0x20] sm:$0xff]
      %v310 = vld [vmem:[%s3 + $0x28] sm:$0xff]
      %v311 = vld [vmem:[%s3 + $0x30] sm:$0xff]
      %v312 = vld [vmem:[%s3 + $0x38] sm:$0xff]
      %v313 = vld [vmem:[%s3 + $0x40] sm:$0xff]
      %v314 = vld [vmem:[%s3 + $0x48] sm:$0xff]
      %v315 = vld [vmem:[%s3 + $0x50] sm:$0xff]
      %v316 = vld [vmem:[%s3 + $0x58] sm:$0xff]
      %v317 = vld [vmem:[%s3 + $0x60] sm:$0xff]
      %v318 = vld [vmem:[%s3 + $0x68] sm:$0xff]
      %v319 = vld [vmem:[%s3 + $0x70] sm:$0xff]
      %v320 = vld [vmem:[%s3 + $0x78] sm:$0xff]
      %321 = vmatprep.subr.mxu0 0.0
      %322 = vmatpush1.msra.mxu0 %v305
      %323 = vmatprep.subr.mxu0 0.0
      %324 = vmatpush1.msra.mxu0 %v306
      %325 = vmatprep.subr.mxu0 0.0
      %326 = vmatpush1.msra.mxu0 %v307
      %327 = vmatprep.subr.mxu0 0.0
      %328 = vmatpush1.msra.mxu0 %v308
      %329 = vmatprep.subr.mxu0 0.0
      %330 = vmatpush1.msra.mxu0 %v309
      %331 = vmatprep.subr.mxu0 0.0
      %332 = vmatpush1.msra.mxu0 %v310
      %333 = vmatprep.subr.mxu0 0.0
      %334 = vmatpush1.msra.mxu0 %v311
      %335 = vmatprep.subr.mxu0 0.0
      %336 = vmatpush1.msra.mxu0 %v312
      %337 = vmatprep.subr.mxu0 0.0
      %338 = vmatpush1.msra.mxu0 %v313
      %339 = vmatprep.subr.mxu0 0.0
      %340 = vmatpush1.msra.mxu0 %v314
      %341 = vmatprep.subr.mxu0 0.0
      %342 = vmatpush1.msra.mxu0 %v315
      %343 = vmatprep.subr.mxu0 0.0
      %344 = vmatpush1.msra.mxu0 %v316
      %345 = vmatprep.subr.mxu0 0.0
      %346 = vmatpush1.msra.mxu0 %v317
      %347 = vmatprep.subr.mxu0 0.0
      %348 = vmatpush1.msra.mxu0 %v318
      %349 = vmatprep.subr.mxu0 0.0
      %350 = vmatpush1.msra.mxu0 %v319
      %351 = vmatprep.subr.mxu0 0.0
      %352 = vmatpush1.msra.mxu0 %v320
      %353 = vmatprep.subr.mxu0 0.0
      %354 = vmatpush1.msra.mxu0 0.0
      %355 = vmatprep.subr.mxu0 0.0
      %356 = vmatpush1.msra.mxu0 0.0
      %357 = vmatprep.subr.mxu0 0.0
      %358 = vmatpush1.msra.mxu0 0.0
      %359 = vmatprep.subr.mxu0 0.0
      %360 = vmatpush1.msra.mxu0 0.0
      %361 = vmatprep.subr.mxu0 0.0
      %362 = vmatpush1.msra.mxu0 0.0
      %363 = vmatprep.subr.mxu0 0.0
      %364 = vmatpush1.msra.mxu0 0.0
      %365 = vmatprep.subr.mxu0 0.0
      %366 = vmatpush1.msra.mxu0 0.0
      %367 = vmatprep.subr.mxu0 0.0
      %368 = vmatpush1.msra.mxu0 0.0
      %369 = vmatprep.subr.mxu0 0.0
      %370 = vmatpush1.msra.mxu0 0.0
      %371 = vmatprep.subr.mxu0 0.0
      %372 = vmatpush1.msra.mxu0 0.0
      %373 = vmatprep.subr.mxu0 0.0
      %374 = vmatpush1.msra.mxu0 0.0
      %375 = vmatprep.subr.mxu0 0.0
      %376 = vmatpush1.msra.mxu0 0.0
      %377 = vmatprep.subr.mxu0 0.0
      %378 = vmatpush1.msra.mxu0 0.0
      %379 = vmatprep.subr.mxu0 0.0
      %380 = vmatpush1.msra.mxu0 0.0
      %381 = vmatprep.subr.mxu0 0.0
      %382 = vmatpush1.msra.mxu0 0.0
      %383 = vmatprep.subr.mxu0 0.0
      %384 = vmatpush1.msra.mxu0 0.0
      %385 = vmatprep.mubr.f32.mxu0 0.0
      %386 = vmatmul.mubr.f32.gmra.mrb[0].mxu0 %v299
      %v387 = vpop.f32.mrb[0].mxu0
      %v388 = vadd.f32 0.0, %v387
      %v389 = vpop.f32.mrb[0].mxu0
      %390 = vmatprep.mubr.f32.mxu0 0.0
      %391 = vmatmul.mubr.f32.gmra.mrb[0].mxu0 %v300
      %v392 = vpop.f32.mrb[0].mxu0
      %v393 = vadd.f32 0.0, %v392
      %v394 = vpop.f32.mrb[0].mxu0
      %395 = vdwg.mxu0
      %s396 = scalar_lea.vmem %s3, 128
      %v397 = vld [vmem:[%s396] sm:$0xff]
      %v398 = vld [vmem:[%s396 + $0x8] sm:$0xff]
      %v399 = vld [vmem:[%s396 + $0x10] sm:$0xff]
      %v400 = vld [vmem:[%s396 + $0x18] sm:$0xff]
      %v401 = vld [vmem:[%s396 + $0x20] sm:$0xff]
      %v402 = vld [vmem:[%s396 + $0x28] sm:$0xff]
      %v403 = vld [vmem:[%s396 + $0x30] sm:$0xff]
      %v404 = vld [vmem:[%s396 + $0x38] sm:$0xff]
      %v405 = vld [vmem:[%s396 + $0x40] sm:$0xff]
      %v406 = vld [vmem:[%s396 + $0x48] sm:$0xff]
      %v407 = vld [vmem:[%s396 + $0x50] sm:$0xff]
      %v408 = vld [vmem:[%s396 + $0x58] sm:$0xff]
      %v409 = vld [vmem:[%s396 + $0x60] sm:$0xff]
      %v410 = vld [vmem:[%s396 + $0x68] sm:$0xff]
      %v411 = vld [vmem:[%s396 + $0x70] sm:$0xff]
      %v412 = vld [vmem:[%s396 + $0x78] sm:$0xff]
      %s413 = scalar_lea.vmem %s3, 256
      %v414 = vld [vmem:[%s413] sm:$0xff]
      %v415 = vld [vmem:[%s413 + $0x8] sm:$0xff]
      %v416 = vld [vmem:[%s413 + $0x10] sm:$0xff]
      %v417 = vld [vmem:[%s413 + $0x18] sm:$0xff]
      %v418 = vld [vmem:[%s413 + $0x20] sm:$0xff]
      %v419 = vld [vmem:[%s413 + $0x28] sm:$0xff]
      %v420 = vld [vmem:[%s413 + $0x30] sm:$0xff]
      %v421 = vld [vmem:[%s413 + $0x38] sm:$0xff]
      %v422 = vld [vmem:[%s413 + $0x40] sm:$0xff]
      %v423 = vld [vmem:[%s413 + $0x48] sm:$0xff]
      %v424 = vld [vmem:[%s413 + $0x50] sm:$0xff]
      %v425 = vld [vmem:[%s413 + $0x58] sm:$0xff]
      %v426 = vld [vmem:[%s413 + $0x60] sm:$0xff]
      %v427 = vld [vmem:[%s413 + $0x68] sm:$0xff]
      %v428 = vld [vmem:[%s413 + $0x70] sm:$0xff]
      %v429 = vld [vmem:[%s413 + $0x78] sm:$0xff]
      %430 = vmatprep.subr.mxu0 0.0
      %431 = vmatpush1.msra.mxu0 %v414
      %432 = vmatprep.subr.mxu0 0.0
      %433 = vmatpush1.msra.mxu0 %v415
      %434 = vmatprep.subr.mxu0 0.0
      %435 = vmatpush1.msra.mxu0 %v416
      %436 = vmatprep.subr.mxu0 0.0
      %437 = vmatpush1.msra.mxu0 %v417
      %438 = vmatprep.subr.mxu0 0.0
      %439 = vmatpush1.msra.mxu0 %v418
      %440 = vmatprep.subr.mxu0 0.0
      %441 = vmatpush1.msra.mxu0 %v419
      %442 = vmatprep.subr.mxu0 0.0
      %443 = vmatpush1.msra.mxu0 %v420
      %444 = vmatprep.subr.mxu0 0.0
      %445 = vmatpush1.msra.mxu0 %v421
      %446 = vmatprep.subr.mxu0 0.0
      %447 = vmatpush1.msra.mxu0 %v422
      %448 = vmatprep.subr.mxu0 0.0
      %449 = vmatpush1.msra.mxu0 %v423
      %450 = vmatprep.subr.mxu0 0.0
      %451 = vmatpush1.msra.mxu0 %v424
      %452 = vmatprep.subr.mxu0 0.0
      %453 = vmatpush1.msra.mxu0 %v425
      %454 = vmatprep.subr.mxu0 0.0
      %455 = vmatpush1.msra.mxu0 %v426
      %456 = vmatprep.subr.mxu0 0.0
      %457 = vmatpush1.msra.mxu0 %v427
      %458 = vmatprep.subr.mxu0 0.0
      %459 = vmatpush1.msra.mxu0 %v428
      %460 = vmatprep.subr.mxu0 0.0
      %461 = vmatpush1.msra.mxu0 %v429
      %462 = vmatprep.subr.mxu0 0.0
      %463 = vmatpush1.msra.mxu0 0.0
      %464 = vmatprep.subr.mxu0 0.0
      %465 = vmatpush1.msra.mxu0 0.0
      %466 = vmatprep.subr.mxu0 0.0
      %467 = vmatpush1.msra.mxu0 0.0
      %468 = vmatprep.subr.mxu0 0.0
      %469 = vmatpush1.msra.mxu0 0.0
      %470 = vmatprep.subr.mxu0 0.0
      %471 = vmatpush1.msra.mxu0 0.0
      %472 = vmatprep.subr.mxu0 0.0
      %473 = vmatpush1.msra.mxu0 0.0
      %474 = vmatprep.subr.mxu0 0.0
      %475 = vmatpush1.msra.mxu0 0.0
      %476 = vmatprep.subr.mxu0 0.0
      %477 = vmatpush1.msra.mxu0 0.0
      %478 = vmatprep.subr.mxu0 0.0
      %479 = vmatpush1.msra.mxu0 0.0
      %480 = vmatprep.subr.mxu0 0.0
      %481 = vmatpush1.msra.mxu0 0.0
      %482 = vmatprep.subr.mxu0 0.0
      %483 = vmatpush1.msra.mxu0 0.0
      %484 = vmatprep.subr.mxu0 0.0
      %485 = vmatpush1.msra.mxu0 0.0
      %486 = vmatprep.subr.mxu0 0.0
      %487 = vmatpush1.msra.mxu0 0.0
      %488 = vmatprep.subr.mxu0 0.0
      %489 = vmatpush1.msra.mxu0 0.0
      %490 = vmatprep.subr.mxu0 0.0
      %491 = vmatpush1.msra.mxu0 0.0
      %492 = vmatprep.subr.mxu0 0.0
      %493 = vmatpush1.msra.mxu0 0.0
      %494 = vmatprep.mubr.f32.mxu0 0.0
      %495 = vmatmul.mubr.f32.gmra.mrb[0].mxu0 %v299
      %v496 = vpop.f32.mrb[0].mxu0
      %v497 = vadd.f32 0.0, %v496
      %v498 = vpop.f32.mrb[0].mxu0
      %499 = vmatprep.mubr.f32.mxu0 0.0
      %500 = vmatmul.mubr.f32.gmra.mrb[0].mxu0 %v300
      %v501 = vpop.f32.mrb[0].mxu0
      %v502 = vadd.f32 0.0, %v501
      %v503 = vpop.f32.mrb[0].mxu0
      %504 = vdwg.mxu0
      %vm505 = vcmask 130048
      %v507 = vsel %vm505, %v301, 0
      %v510 = vsel %vm505, %v302, 0
      %512 = vmatprep.subr.mxu0 0.0
      %513 = vmatpush1.msra.mxu0 %v388
      %514 = vmatprep.subr.mxu0 0.0
      %515 = vmatpush1.msra.mxu0 %v393
      %516 = vmatprep.subr.mxu0 0.0
      %517 = vmatpush1.msra.mxu0 0.0
      %518 = vmatprep.subr.mxu0 0.0
      %519 = vmatpush1.msra.mxu0 0.0
      %520 = vmatprep.subr.mxu0 0.0
      %521 = vmatpush1.msra.mxu0 0.0
      %522 = vmatprep.subr.mxu0 0.0
      %523 = vmatpush1.msra.mxu0 0.0
      %524 = vmatprep.subr.mxu0 0.0
      %525 = vmatpush1.msra.mxu0 0.0
      %526 = vmatprep.subr.mxu0 0.0
      %527 = vmatpush1.msra.mxu0 0.0
      %528 = vmatprep.subr.mxu0 0.0
      %529 = vmatpush1.msra.mxu0 0.0
      %530 = vmatprep.subr.mxu0 0.0
      %531 = vmatpush1.msra.mxu0 0.0
      %532 = vmatprep.subr.mxu0 0.0
      %533 = vmatpush1.msra.mxu0 0.0
      %534 = vmatprep.subr.mxu0 0.0
      %535 = vmatpush1.msra.mxu0 0.0
      %536 = vmatprep.subr.mxu0 0.0
      %537 = vmatpush1.msra.mxu0 0.0
      %538 = vmatprep.subr.mxu0 0.0
      %539 = vmatpush1.msra.mxu0 0.0
      %540 = vmatprep.subr.mxu0 0.0
      %541 = vmatpush1.msra.mxu0 0.0
      %542 = vmatprep.subr.mxu0 0.0
      %543 = vmatpush1.msra.mxu0 0.0
      %544 = vmatprep.subr.mxu0 0.0
      %545 = vmatpush1.msra.mxu0 0.0
      %546 = vmatprep.subr.mxu0 0.0
      %547 = vmatpush1.msra.mxu0 0.0
      %548 = vmatprep.subr.mxu0 0.0
      %549 = vmatpush1.msra.mxu0 0.0
      %550 = vmatprep.subr.mxu0 0.0
      %551 = vmatpush1.msra.mxu0 0.0
      %552 = vmatprep.subr.mxu0 0.0
      %553 = vmatpush1.msra.mxu0 0.0
      %554 = vmatprep.subr.mxu0 0.0
      %555 = vmatpush1.msra.mxu0 0.0
      %556 = vmatprep.subr.mxu0 0.0
      %557 = vmatpush1.msra.mxu0 0.0
      %558 = vmatprep.subr.mxu0 0.0
      %559 = vmatpush1.msra.mxu0 0.0
      %560 = vmatprep.subr.mxu0 0.0
      %561 = vmatpush1.msra.mxu0 0.0
      %562 = vmatprep.subr.mxu0 0.0
      %563 = vmatpush1.msra.mxu0 0.0
      %564 = vmatprep.subr.mxu0 0.0
      %565 = vmatpush1.msra.mxu0 0.0
      %566 = vmatprep.subr.mxu0 0.0
      %567 = vmatpush1.msra.mxu0 0.0
      %568 = vmatprep.subr.mxu0 0.0
      %569 = vmatpush1.msra.mxu0 0.0
      %570 = vmatprep.subr.mxu0 0.0
      %571 = vmatpush1.msra.mxu0 0.0
      %572 = vmatprep.subr.mxu0 0.0
      %573 = vmatpush1.msra.mxu0 0.0
      %574 = vmatprep.subr.mxu0 0.0
      %575 = vmatpush1.msra.mxu0 0.0
      %576 = vmatprep.mubr.f32.mxu0 0.0
      %577 = vmatmul.mubr.f32.gmra.mrb[0].mxu0 %v507
      %v578 = vpop.f32.mrb[0].mxu0
      %v579 = vadd.f32 0.0, %v578
      %v580 = vpop.f32.mrb[0].mxu0
      %581 = vmatprep.mubr.f32.mxu0 0.0
      %582 = vmatmul.mubr.f32.gmra.mrb[0].mxu0 %v510
      %v583 = vpop.f32.mrb[0].mxu0
      %v584 = vadd.f32 0.0, %v583
      %v585 = vpop.f32.mrb[0].mxu0
      %586 = vdwg.mxu0
      %587 = vmatprep.subr.mxu0 0.0
      %588 = vmatpush1.msra.mxu0 %v397
      %589 = vmatprep.subr.mxu0 0.0
      %590 = vmatpush1.msra.mxu0 %v398
      %591 = vmatprep.subr.mxu0 0.0
      %592 = vmatpush1.msra.mxu0 %v399
      %593 = vmatprep.subr.mxu0 0.0
      %594 = vmatpush1.msra.mxu0 %v400
      %595 = vmatprep.subr.mxu0 0.0
      %596 = vmatpush1.msra.mxu0 %v401
      %597 = vmatprep.subr.mxu0 0.0
      %598 = vmatpush1.msra.mxu0 %v402
      %599 = vmatprep.subr.mxu0 0.0
      %600 = vmatpush1.msra.mxu0 %v403
      %601 = vmatprep.subr.mxu0 0.0
      %602 = vmatpush1.msra.mxu0 %v404
      %603 = vmatprep.subr.mxu0 0.0
      %604 = vmatpush1.msra.mxu0 %v405
      %605 = vmatprep.subr.mxu0 0.0
      %606 = vmatpush1.msra.mxu0 %v406
      %607 = vmatprep.subr.mxu0 0.0
      %608 = vmatpush1.msra.mxu0 %v407
      %609 = vmatprep.subr.mxu0 0.0
      %610 = vmatpush1.msra.mxu0 %v408
      %611 = vmatprep.subr.mxu0 0.0
      %612 = vmatpush1.msra.mxu0 %v409
      %613 = vmatprep.subr.mxu0 0.0
      %614 = vmatpush1.msra.mxu0 %v410
      %615 = vmatprep.subr.mxu0 0.0
      %616 = vmatpush1.msra.mxu0 %v411
      %617 = vmatprep.subr.mxu0 0.0
      %618 = vmatpush1.msra.mxu0 %v412
      %619 = vmatprep.subr.mxu0 0.0
      %620 = vmatpush1.msra.mxu0 0.0
      %621 = vmatprep.subr.mxu0 0.0
      %622 = vmatpush1.msra.mxu0 0.0
      %623 = vmatprep.subr.mxu0 0.0
      %624 = vmatpush1.msra.mxu0 0.0
      %625 = vmatprep.subr.mxu0 0.0
      %626 = vmatpush1.msra.mxu0 0.0
      %627 = vmatprep.subr.mxu0 0.0
      %628 = vmatpush1.msra.mxu0 0.0
      %629 = vmatprep.subr.mxu0 0.0
      %630 = vmatpush1.msra.mxu0 0.0
      %631 = vmatprep.subr.mxu0 0.0
      %632 = vmatpush1.msra.mxu0 0.0
      %633 = vmatprep.subr.mxu0 0.0
      %634 = vmatpush1.msra.mxu0 0.0
      %635 = vmatprep.subr.mxu0 0.0
      %636 = vmatpush1.msra.mxu0 0.0
      %637 = vmatprep.subr.mxu0 0.0
      %638 = vmatpush1.msra.mxu0 0.0
      %639 = vmatprep.subr.mxu0 0.0
      %640 = vmatpush1.msra.mxu0 0.0
      %641 = vmatprep.subr.mxu0 0.0
      %642 = vmatpush1.msra.mxu0 0.0
      %643 = vmatprep.subr.mxu0 0.0
      %644 = vmatpush1.msra.mxu0 0.0
      %645 = vmatprep.subr.mxu0 0.0
      %646 = vmatpush1.msra.mxu0 0.0
      %647 = vmatprep.subr.mxu0 0.0
      %648 = vmatpush1.msra.mxu0 0.0
      %649 = vmatprep.subr.mxu0 0.0
      %650 = vmatpush1.msra.mxu0 0.0
      %651 = vmatprep.mubr.f32.mxu0 0.0
      %652 = vmatmul.mubr.f32.gmra.mrb[0].mxu0 %v299
      %v653 = vpop.f32.mrb[0].mxu0
      %v654 = vadd.f32 %v579, %v653
      %v655 = vpop.f32.mrb[0].mxu0
      %656 = vmatprep.mubr.f32.mxu0 0.0
      %657 = vmatmul.mubr.f32.gmra.mrb[0].mxu0 %v300
      %v658 = vpop.f32.mrb[0].mxu0
      %v659 = vadd.f32 %v584, %v658
      %v660 = vpop.f32.mrb[0].mxu0
      %661 = vdwg.mxu0
      %v663 = vsel %vm505, %v303, 0
      %v666 = vsel %vm505, %v304, 0
      %668 = vmatprep.subr.mxu0 0.0
      %669 = vmatpush1.msra.mxu0 %v497
      %670 = vmatprep.subr.mxu0 0.0
      %671 = vmatpush1.msra.mxu0 %v502
      %672 = vmatprep.subr.mxu0 0.0
      %673 = vmatpush1.msra.mxu0 0.0
      %674 = vmatprep.subr.mxu0 0.0
      %675 = vmatpush1.msra.mxu0 0.0
      %676 = vmatprep.subr.mxu0 0.0
      %677 = vmatpush1.msra.mxu0 0.0
      %678 = vmatprep.subr.mxu0 0.0
      %679 = vmatpush1.msra.mxu0 0.0
      %680 = vmatprep.subr.mxu0 0.0
      %681 = vmatpush1.msra.mxu0 0.0
      %682 = vmatprep.subr.mxu0 0.0
      %683 = vmatpush1.msra.mxu0 0.0
      %684 = vmatprep.subr.mxu0 0.0
      %685 = vmatpush1.msra.mxu0 0.0
      %686 = vmatprep.subr.mxu0 0.0
      %687 = vmatpush1.msra.mxu0 0.0
      %688 = vmatprep.subr.mxu0 0.0
      %689 = vmatpush1.msra.mxu0 0.0
      %690 = vmatprep.subr.mxu0 0.0
      %691 = vmatpush1.msra.mxu0 0.0
      %692 = vmatprep.subr.mxu0 0.0
      %693 = vmatpush1.msra.mxu0 0.0
      %694 = vmatprep.subr.mxu0 0.0
      %695 = vmatpush1.msra.mxu0 0.0
      %696 = vmatprep.subr.mxu0 0.0
      %697 = vmatpush1.msra.mxu0 0.0
      %698 = vmatprep.subr.mxu0 0.0
      %699 = vmatpush1.msra.mxu0 0.0
      %700 = vmatprep.subr.mxu0 0.0
      %701 = vmatpush1.msra.mxu0 0.0
      %702 = vmatprep.subr.mxu0 0.0
      %703 = vmatpush1.msra.mxu0 0.0
      %704 = vmatprep.subr.mxu0 0.0
      %705 = vmatpush1.msra.mxu0 0.0
      %706 = vmatprep.subr.mxu0 0.0
      %707 = vmatpush1.msra.mxu0 0.0
      %708 = vmatprep.subr.mxu0 0.0
      %709 = vmatpush1.msra.mxu0 0.0
      %710 = vmatprep.subr.mxu0 0.0
      %711 = vmatpush1.msra.mxu0 0.0
      %712 = vmatprep.subr.mxu0 0.0
      %713 = vmatpush1.msra.mxu0 0.0
      %714 = vmatprep.subr.mxu0 0.0
      %715 = vmatpush1.msra.mxu0 0.0
      %716 = vmatprep.subr.mxu0 0.0
      %717 = vmatpush1.msra.mxu0 0.0
      %718 = vmatprep.subr.mxu0 0.0
      %719 = vmatpush1.msra.mxu0 0.0
      %720 = vmatprep.subr.mxu0 0.0
      %721 = vmatpush1.msra.mxu0 0.0
      %722 = vmatprep.subr.mxu0 0.0
      %723 = vmatpush1.msra.mxu0 0.0
      %724 = vmatprep.subr.mxu0 0.0
      %725 = vmatpush1.msra.mxu0 0.0
      %726 = vmatprep.subr.mxu0 0.0
      %727 = vmatpush1.msra.mxu0 0.0
      %728 = vmatprep.subr.mxu0 0.0
      %729 = vmatpush1.msra.mxu0 0.0
      %730 = vmatprep.subr.mxu0 0.0
      %731 = vmatpush1.msra.mxu0 0.0
      %732 = vmatprep.mubr.f32.mxu0 0.0
      %733 = vmatmul.mubr.f32.gmra.mrb[0].mxu0 %v663
      %v734 = vpop.f32.mrb[0].mxu0
      %v735 = vadd.f32 0.0, %v734
      %v736 = vpop.f32.mrb[0].mxu0
      %737 = vmatprep.mubr.f32.mxu0 0.0
      %738 = vmatmul.mubr.f32.gmra.mrb[0].mxu0 %v666
      %v739 = vpop.f32.mrb[0].mxu0
      %v740 = vadd.f32 0.0, %v739
      %v741 = vpop.f32.mrb[0].mxu0
      %742 = vdwg.mxu0
      %v743 = vadd.f32 %v654, %v735
      %v744 = vadd.f32 %v659, %v740
      %v745 = vld [vmem:[%s4] sm:$0x1]
      %v747 = vlaneseq
      %v748 = vshrl.u32 %v747, 7
      %v749 = vsub.s32 0, %v748
      %v750 = vrot.slane %v745, %v749
      %v752 = vadd.f32 %v743, %v750
      %v753 = vadd.f32 %v744, %v750
      %754 = vst [vmem:[%s278] sm:$0xff] %v752
      %755 = vst [vmem:[%s278 + $0x8] sm:$0xff] %v753
      %p756 = scmp.lt.s32.totalorder %s18, 1
      %s757 = scalar_select %p756, %s18, 1
      %s758 = smul.addr %s757, 2
      %s759 = smul.addr %s758, 8
      %s760 = scalar_lea.vmem %s7, %s759
      // Predicated region
      $region49: #{conv_ycf_forward.3} parent=47 // pred_check
        %p761 = pneg %p188
      $region50: #{conv_ycf_forward.3} parent=47 // pred_check_branch
        %763 = sbr.rel (%p761) target = $region52
      $region51: #{conv_ycf_forward.3} parent=47 // pred_region
        _
      $region52: #{conv_ycf_forward.3} parent=47 // pred_fallthru
        _
    $region48: #{conv_ycf_forward.3} parent=5 // pred_fallthru
      _
    %p764 = scmp.le.s32.totalorder 2, %s13
    // Predicated region
    $region53: #{conv_ycf_forward.3} parent=5 // pred_check
      %p765 = pneg %p764
    $region54: #{conv_ycf_forward.3} parent=5 // pred_check_branch
      %767 = sbr.rel (%p765) target = $region56
    $region55: #{conv_ycf_forward.3} parent=5 // pred_region
      %s768 = ssub.s32 %s13, 2
      // Predicated region
      $region57: #{conv_ycf_forward.3} parent=55 // pred_check
        %p769 = pneg %p194
      $region58: #{conv_ycf_forward.3} parent=55 // pred_check_branch
        %771 = sbr.rel (%p769) target = $region60
      $region59: #{conv_ycf_forward.3} parent=55 // pred_region
        %p772 = scmp.lt.s32.totalorder %s19, 1
        %s773 = scalar_select %p772, %s19, 1
        %s774 = smul.addr %s773, 2
        %s775 = smul.addr %s774, 8
        %s776 = scalar_lea.vmem %s7, %s775
      $region60: #{conv_ycf_forward.3} parent=55 // pred_fallthru
        _
    $region56: #{conv_ycf_forward.3} parent=5 // pred_fallthru
      _
  $region6: #{conv_ycf_forward.3} parent=0 // loop_footer
    %s17 = sadd.s32 1, %s13
  $region7: #{conv_ycf_forward.3} parent=0 // loop_footer_branch
    %12 = sbr.rel target = $region3
  $region8: #{conv_ycf_forward.3} parent=0 // loop_exit
    _

</llo_original>
